<compile_context>
chip_gen: v6e
topology: v6e:2x2x1
jax: 0.10.0
libtpu: 0.0.40
codegen_flags: <defaults>
</compile_context>

<pallas_src>
import functools

import jax
import jax.numpy as jnp
from jax import lax
from jax.experimental import pallas as pl
from jax.experimental.pallas import tpu as pltpu

KSIZE = 7
PAD = (KSIZE - 1) // 2  # 3


def _attention_gate_kernel(x_ref, mask_ref, w_ref, bn_ref, o_ref, *, W, nb):
    """One grid step: nb images, fused ZPool + 7x7 conv + BN(eval) + sigmoid + gate.

    x_ref/o_ref: (nb, C, HWp) VMEM  lane-dense flattened (padded) spatial dim
    mask_ref:    (14, HWp)    VMEM  rows 0..6 = row-validity masks (di=-3..3),
                                    rows 7..13 = col-validity masks (dj=-3..3);
                                    grid-invariant (constant index_map -> fetched once)
    w_ref:       (98,) SMEM         conv weight, flattened [in_ch(max,mean), ki, kj]
    bn_ref:      (2,)  SMEM         folded eval-mode BN affine (a, b)
    """
    HWp = x_ref.shape[2]
    two_nb = 2 * nb

    # ---- ZPool: per-image channel max & mean, stacked into sublanes ----
    x = x_ref[...]                                   # (nb, C, HWp)
    mx = jnp.max(x, axis=1)                          # (nb, HWp)
    mn = jnp.mean(x, axis=1)                         # (nb, HWp)
    stacked = jnp.concatenate([mx, mn], axis=0)      # (2nb, HWp): [0:nb]=max, [nb:2nb]=mean

    # Per-sublane channel selector (0 on max rows, 1 on mean rows), built once.
    chan_sel = (lax.broadcasted_iota(jnp.int32, (two_nb, 1), 0) >= nb).astype(jnp.float32)

    # ---- 7x7 conv (2->1 ch, stride 1, pad 3, no bias), separable roll structure ----
    # out[p] = sum_{di,dj} w[c, di+3, dj+3] * map_c[p + di*W + dj]   (zero outside image)
    # Column pass: 7 lane rolls + 6 col-mask muls, shared by all 7 row offsets.
    cmasked = []
    for dj in range(-PAD, PAD + 1):
        t = stacked if dj == 0 else pltpu.roll(stacked, (-dj) % HWp, axis=1)
        if dj != 0:
            t = t * mask_ref[KSIZE + PAD + dj: KSIZE + PAD + dj + 1, :]
        cmasked.append(t)

    # Row pass: per di, one weighted sum over dj, one roll by di*W, one row-mask mul.
    acc = jnp.zeros((two_nb, HWp), jnp.float32)
    for di in range(-PAD, PAD + 1):
        inner = None
        for dj in range(-PAD, PAD + 1):
            t = (di + PAD) * KSIZE + (dj + PAD)
            w_max = w_ref[t]
            w_mean = w_ref[KSIZE * KSIZE + t]
            wcol = w_max + (w_mean - w_max) * chan_sel        # (2nb, 1) per-sublane weight
            term = wcol * cmasked[dj + PAD]
            inner = term if inner is None else inner + term
        rolled = inner if di == 0 else pltpu.roll(inner, (-di * W) % HWp, axis=1)
        if di != 0:
            rolled = rolled * mask_ref[PAD + di: PAD + di + 1, :]
        acc = acc + rolled

    conv = acc[:nb, :] + acc[nb:, :]                 # (nb, HWp): max-ch + mean-ch contributions

    # ---- BatchNorm2d(1) (eval-mode, folded affine) + sigmoid via EUP tanh ----
    y = conv * bn_ref[0] + bn_ref[1]
    scale = 0.5 * (jnp.tanh(0.5 * y) + 1.0)          # == sigmoid(y)

    # ---- gate: re-read x (short live range), lane-dense store ----
    o_ref[...] = x_ref[...] * scale[:, None, :]


def _vmem_capacity_bytes():
    try:
        cap = getattr(pltpu.get_tpu_info(), "vmem_capacity_bytes", None)
        if cap:
            return int(cap)
    except Exception:
        pass
    return 64 * 1024 * 1024          # conservative fallback: v7x per-TensorCore VMEM


def _vmem_needed(nb, C, HWp):
    blk = nb * C * HWp * 4           # one x / out block
    masks = 14 * HWp * 4
    work = 24 * nb * HWp * 4         # stacked / 7 cmasked / inner / acc spills (~12 x (2nb,HWp))
    return 4 * blk + 2 * masks + work  # in+out double-buffered + masks + working set


def attention_gate(x, conv_w, bn_gamma, bn_beta, bn_mean, bn_var, eps=1e-5):
    """x: (N, C, H, W) f32; conv_w: (1, 2, 7, 7) f32."""
    N, C, H, W = x.shape
    HW = H * W
    # Pad flattened spatial dim to a lane multiple -> unmasked full-width vld/vst.
    HWp = ((HW + 127) // 128) * 128

    # Fold eval-mode BatchNorm into a single affine transform y -> a*y + b.
    # TODO(synk): PyTorch BatchNorm2d defaults to train mode (batch stats); eval-mode running stats used here.
    a = bn_gamma / jnp.sqrt(bn_var + eps)
    b = bn_beta - bn_mean * a
    bn_ab = jnp.stack([a, b]).astype(jnp.float32)          # (2,)
    w_flat = conv_w.reshape(-1).astype(jnp.float32)        # (98,) [c, ki, kj]

    # Grid-invariant 7x7 boundary masks, precomputed once (hoisted out of the kernel body).
    idx = jnp.arange(HWp, dtype=jnp.int32)
    rr, cc = idx // W, idx % W
    rows = []
    for vals, hi in ((rr, H), (cc, W)):
        for d in range(-PAD, PAD + 1):
            if d > 0:
                rows.append(vals < hi - d)
            elif d < 0:
                rows.append(vals >= -d)
            else:
                rows.append(jnp.ones((HWp,), bool))
    masks = jnp.stack(rows).astype(jnp.float32)            # (14, HWp)

    # Lane-dense layout: flatten spatial dims (free reshape), pad only if needed.
    x_flat = x.reshape(N, C, HW)
    if HWp != HW:
        x_flat = jnp.pad(x_flat, ((0, 0), (0, 0), (0, HWp - HW)))

    # Fold several images per grid step (<=4 so the 2*nb stacked ZPool maps fill all 8
    # vreg sublanes in the conv loop) while staying inside the per-core VMEM budget.
    vmem_cap = _vmem_capacity_bytes()
    budget = int(vmem_cap * 0.75)
    nb = 1
    for cand in range(min(4, N), 0, -1):
        if N % cand == 0 and _vmem_needed(cand, C, HWp) <= budget:
            nb = cand
            break
    # TODO(synk): for very large C*HWp (v7x, 64 MiB VMEM) add a spatial grid axis over H
    # with a +/-3-row halo instead of whole-image blocks.

    needed = _vmem_needed(nb, C, HWp)
    vmem_limit = int(min(vmem_cap - (4 << 20), max(needed + (16 << 20), 32 << 20)))

    cost = pl.CostEstimate(
        flops=int(N * HW * (2 * C + 4 * KSIZE * KSIZE + C + 4)),
        transcendentals=int(N * HW),
        bytes_accessed=int(2 * N * C * HW * 4 + 14 * HWp * 4 + w_flat.size * 4),
    )

    out_flat = pl.pallas_call(
        functools.partial(_attention_gate_kernel, W=W, nb=nb),
        out_shape=jax.ShapeDtypeStruct((N, C, HWp), jnp.float32),
        grid=(N // nb,),
        in_specs=[
            pl.BlockSpec((nb, C, HWp), lambda n: (n, 0, 0)),
            pl.BlockSpec((14, HWp), lambda n: (0, 0)),          # constant block: DMA'd once
            pl.BlockSpec(memory_space=pltpu.MemorySpace.SMEM),
            pl.BlockSpec(memory_space=pltpu.MemorySpace.SMEM),
        ],
        out_specs=pl.BlockSpec((nb, C, HWp), lambda n: (n, 0, 0)),
        compiler_params=pltpu.CompilerParams(
            dimension_semantics=("parallel",),
            vmem_limit_bytes=vmem_limit,
        ),
        cost_estimate=cost,
    )(x_flat, masks, w_flat, bn_ab)

    return out_flat[..., :HW].reshape(N, C, H, W)


if __name__ == "__main__":
    key = jax.random.PRNGKey(0)
    kx, kw, kg, kb = jax.random.split(key, 4)

    N, C, H, W = 2, 4, 16, 16
    x = jax.random.normal(kx, (N, C, H, W), dtype=jnp.float32)

    # Deterministic synthetic parameters (shapes from the module __init__).
    conv_w = jax.random.normal(kw, (1, 2, KSIZE, KSIZE), dtype=jnp.float32) * 0.1
    bn_gamma = 1.0 + 0.1 * jax.random.normal(kg, (), dtype=jnp.float32)
    bn_beta = 0.1 * jax.random.normal(kb, (), dtype=jnp.float32)
    bn_mean = jnp.float32(0.0)   # running stats (eval-mode BatchNorm)
    bn_var = jnp.float32(1.0)

    out = attention_gate(x, conv_w, bn_gamma, bn_beta, bn_mean, bn_var)
    jax.block_until_ready(out)

    # Pure-JAX reference check.
    mx = jnp.max(x, axis=1, keepdims=True)
    mn = jnp.mean(x, axis=1, keepdims=True)
    comp = jnp.concatenate([mx, mn], axis=1)                       # (N,2,H,W)
    conv = jax.lax.conv_general_dilated(
        comp, conv_w, window_strides=(1, 1), padding=((PAD, PAD), (PAD, PAD)),
        dimension_numbers=("NCHW", "OIHW", "NCHW"))
    a = bn_gamma / jnp.sqrt(bn_var + 1e-5)
    ref = x * jax.nn.sigmoid(conv * a + (bn_beta - bn_mean * a))
    assert jnp.allclose(out, ref, atol=1e-4, rtol=1e-4), "mismatch vs reference"

    print("KERNEL_OK")
</pallas_src>

<mosaic_0001>
module attributes {stable_mosaic.version = 11 : i64} {
  func.func @_attention_gate_kernel(%arg0: i32, %arg1: memref<2x4x256xf32, #tpu.memory_space<vmem>>, %arg2: memref<14x256xf32, #tpu.memory_space<vmem>>, %arg3: memref<98xf32, #tpu.memory_space<smem>>, %arg4: memref<2xf32, #tpu.memory_space<smem>>, %arg5: memref<2x4x256xf32, #tpu.memory_space<vmem>>) attributes {dimension_semantics = [#tpu.dimension_semantics<parallel>], iteration_bounds = array<i64: 1>, scalar_prefetch = 0 : i64, scratch_operands = 0 : i64, tpu.core_type = #tpu.core_type<tc>, window_params = [{transform_indices = @transform_0, window_bounds = array<i64: 2, 4, 256>}, {pipeline_mode = #tpu.pipeline_mode<synchronous>, transform_indices = @transform_1, window_bounds = array<i64: 14, 256>}, {transform_indices = @transform_2, window_bounds = array<i64: 98>}, {transform_indices = @transform_3, window_bounds = array<i64: 2>}, {transform_indices = @transform_4, window_bounds = array<i64: 2, 4, 256>}]} {
    %c0 = arith.constant 0 : index
    %c0_0 = arith.constant 0 : index
    %c0_1 = arith.constant 0 : index
    %0 = vector.load %arg1[%c0, %c0_0, %c0_1] : memref<2x4x256xf32, #tpu.memory_space<vmem>>, vector<2x4x256xf32>
    %cst = arith.constant dense<0xFF800000> : vector<2x256xf32>
    %1 = vector.multi_reduction <maximumf>, %0, %cst [1] : vector<2x4x256xf32> to vector<2x256xf32>
    %cst_2 = arith.constant dense<0.000000e+00> : vector<2x256xf32>
    %2 = vector.multi_reduction <add>, %0, %cst_2 [1] : vector<2x4x256xf32> to vector<2x256xf32>
    %cst_3 = arith.constant 4.000000e+00 : f32
    %3 = vector.broadcast %cst_3 : f32 to vector<2x256xf32>
    %4 = arith.divf %2, %3 : vector<2x256xf32>
    %5 = tpu.concatenate %1, %4 in 0 : vector<2x256xf32>, vector<2x256xf32> -> vector<4x256xf32>
    %6 = tpu.iota {dimensions = array<i32: 0>} : vector<4x1xi32>
    %c2_i32 = arith.constant 2 : i32
    %7 = vector.broadcast %c2_i32 : i32 to vector<4x1xi32>
    %8 = arith.cmpi sge, %6, %7 : vector<4x1xi32>
    %9 = arith.extui %8 : vector<4x1xi1> to vector<4x1xi32>
    %10 = arith.sitofp %9 : vector<4x1xi32> to vector<4x1xf32>
    %c3_i32 = arith.constant 3 : i32
    %11 = tpu.dynamic_rotate %5 by %c3_i32 dim 1 : vector<4x256xf32>, i32 -> vector<4x256xf32>
    %c7 = arith.constant 7 : index
    %c0_4 = arith.constant 0 : index
    %12 = vector.load %arg2[%c7, %c0_4] : memref<14x256xf32, #tpu.memory_space<vmem>>, vector<1x256xf32>
    %13 = vector.broadcast %12 : vector<1x256xf32> to vector<4x256xf32>
    %14 = arith.mulf %11, %13 : vector<4x256xf32>
    %c2_i32_5 = arith.constant 2 : i32
    %15 = tpu.dynamic_rotate %5 by %c2_i32_5 dim 1 : vector<4x256xf32>, i32 -> vector<4x256xf32>
    %c8 = arith.constant 8 : index
    %c0_6 = arith.constant 0 : index
    %16 = vector.load %arg2[%c8, %c0_6] : memref<14x256xf32, #tpu.memory_space<vmem>>, vector<1x256xf32>
    %17 = vector.broadcast %16 : vector<1x256xf32> to vector<4x256xf32>
    %18 = arith.mulf %15, %17 : vector<4x256xf32>
    %c1_i32 = arith.constant 1 : i32
    %19 = tpu.dynamic_rotate %5 by %c1_i32 dim 1 : vector<4x256xf32>, i32 -> vector<4x256xf32>
    %c9 = arith.constant 9 : index
    %c0_7 = arith.constant 0 : index
    %20 = vector.load %arg2[%c9, %c0_7] : memref<14x256xf32, #tpu.memory_space<vmem>>, vector<1x256xf32>
    %21 = vector.broadcast %20 : vector<1x256xf32> to vector<4x256xf32>
    %22 = arith.mulf %19, %21 : vector<4x256xf32>
    %c255_i32 = arith.constant 255 : i32
    %23 = tpu.dynamic_rotate %5 by %c255_i32 dim 1 : vector<4x256xf32>, i32 -> vector<4x256xf32>
    %c11 = arith.constant 11 : index
    %c0_8 = arith.constant 0 : index
    %24 = vector.load %arg2[%c11, %c0_8] : memref<14x256xf32, #tpu.memory_space<vmem>>, vector<1x256xf32>
    %25 = vector.broadcast %24 : vector<1x256xf32> to vector<4x256xf32>
    %26 = arith.mulf %23, %25 : vector<4x256xf32>
    %c254_i32 = arith.constant 254 : i32
    %27 = tpu.dynamic_rotate %5 by %c254_i32 dim 1 : vector<4x256xf32>, i32 -> vector<4x256xf32>
    %c12 = arith.constant 12 : index
    %c0_9 = arith.constant 0 : index
    %28 = vector.load %arg2[%c12, %c0_9] : memref<14x256xf32, #tpu.memory_space<vmem>>, vector<1x256xf32>
    %29 = vector.broadcast %28 : vector<1x256xf32> to vector<4x256xf32>
    %30 = arith.mulf %27, %29 : vector<4x256xf32>
    %c253_i32 = arith.constant 253 : i32
    %31 = tpu.dynamic_rotate %5 by %c253_i32 dim 1 : vector<4x256xf32>, i32 -> vector<4x256xf32>
    %c13 = arith.constant 13 : index
    %c0_10 = arith.constant 0 : index
    %32 = vector.load %arg2[%c13, %c0_10] : memref<14x256xf32, #tpu.memory_space<vmem>>, vector<1x256xf32>
    %33 = vector.broadcast %32 : vector<1x256xf32> to vector<4x256xf32>
    %34 = arith.mulf %31, %33 : vector<4x256xf32>
    %cst_11 = arith.constant 0.000000e+00 : f32
    %35 = vector.broadcast %cst_11 : f32 to vector<4x256xf32>
    %c0_12 = arith.constant 0 : index
    %36 = memref.load %arg3[%c0_12] : memref<98xf32, #tpu.memory_space<smem>>
    %c49 = arith.constant 49 : index
    %37 = memref.load %arg3[%c49] : memref<98xf32, #tpu.memory_space<smem>>
    %38 = arith.subf %37, %36 : f32
    %39 = vector.broadcast %38 : f32 to vector<4x1xf32>
    %40 = arith.mulf %39, %10 : vector<4x1xf32>
    %41 = vector.broadcast %36 : f32 to vector<4x1xf32>
    %42 = arith.addf %41, %40 : vector<4x1xf32>
    %43 = vector.broadcast %42 : vector<4x1xf32> to vector<4x256xf32>
    %44 = arith.mulf %43, %14 : vector<4x256xf32>
    %c1 = arith.constant 1 : index
    %45 = memref.load %arg3[%c1] : memref<98xf32, #tpu.memory_space<smem>>
    %c50 = arith.constant 50 : index
    %46 = memref.load %arg3[%c50] : memref<98xf32, #tpu.memory_space<smem>>
    %47 = arith.subf %46, %45 : f32
    %48 = vector.broadcast %47 : f32 to vector<4x1xf32>
    %49 = arith.mulf %48, %10 : vector<4x1xf32>
    %50 = vector.broadcast %45 : f32 to vector<4x1xf32>
    %51 = arith.addf %50, %49 : vector<4x1xf32>
    %52 = vector.broadcast %51 : vector<4x1xf32> to vector<4x256xf32>
    %53 = arith.mulf %52, %18 : vector<4x256xf32>
    %54 = arith.addf %44, %53 : vector<4x256xf32>
    %c2 = arith.constant 2 : index
    %55 = memref.load %arg3[%c2] : memref<98xf32, #tpu.memory_space<smem>>
    %c51 = arith.constant 51 : index
    %56 = memref.load %arg3[%c51] : memref<98xf32, #tpu.memory_space<smem>>
    %57 = arith.subf %56, %55 : f32
    %58 = vector.broadcast %57 : f32 to vector<4x1xf32>
    %59 = arith.mulf %58, %10 : vector<4x1xf32>
    %60 = vector.broadcast %55 : f32 to vector<4x1xf32>
    %61 = arith.addf %60, %59 : vector<4x1xf32>
    %62 = vector.broadcast %61 : vector<4x1xf32> to vector<4x256xf32>
    %63 = arith.mulf %62, %22 : vector<4x256xf32>
    %64 = arith.addf %54, %63 : vector<4x256xf32>
    %c3 = arith.constant 3 : index
    %65 = memref.load %arg3[%c3] : memref<98xf32, #tpu.memory_space<smem>>
    %c52 = arith.constant 52 : index
    %66 = memref.load %arg3[%c52] : memref<98xf32, #tpu.memory_space<smem>>
    %67 = arith.subf %66, %65 : f32
    %68 = vector.broadcast %67 : f32 to vector<4x1xf32>
    %69 = arith.mulf %68, %10 : vector<4x1xf32>
    %70 = vector.broadcast %65 : f32 to vector<4x1xf32>
    %71 = arith.addf %70, %69 : vector<4x1xf32>
    %72 = vector.broadcast %71 : vector<4x1xf32> to vector<4x256xf32>
    %73 = arith.mulf %72, %5 : vector<4x256xf32>
    %74 = arith.addf %64, %73 : vector<4x256xf32>
    %c4 = arith.constant 4 : index
    %75 = memref.load %arg3[%c4] : memref<98xf32, #tpu.memory_space<smem>>
    %c53 = arith.constant 53 : index
    %76 = memref.load %arg3[%c53] : memref<98xf32, #tpu.memory_space<smem>>
    %77 = arith.subf %76, %75 : f32
    %78 = vector.broadcast %77 : f32 to vector<4x1xf32>
    %79 = arith.mulf %78, %10 : vector<4x1xf32>
    %80 = vector.broadcast %75 : f32 to vector<4x1xf32>
    %81 = arith.addf %80, %79 : vector<4x1xf32>
    %82 = vector.broadcast %81 : vector<4x1xf32> to vector<4x256xf32>
    %83 = arith.mulf %82, %26 : vector<4x256xf32>
    %84 = arith.addf %74, %83 : vector<4x256xf32>
    %c5 = arith.constant 5 : index
    %85 = memref.load %arg3[%c5] : memref<98xf32, #tpu.memory_space<smem>>
    %c54 = arith.constant 54 : index
    %86 = memref.load %arg3[%c54] : memref<98xf32, #tpu.memory_space<smem>>
    %87 = arith.subf %86, %85 : f32
    %88 = vector.broadcast %87 : f32 to vector<4x1xf32>
    %89 = arith.mulf %88, %10 : vector<4x1xf32>
    %90 = vector.broadcast %85 : f32 to vector<4x1xf32>
    %91 = arith.addf %90, %89 : vector<4x1xf32>
    %92 = vector.broadcast %91 : vector<4x1xf32> to vector<4x256xf32>
    %93 = arith.mulf %92, %30 : vector<4x256xf32>
    %94 = arith.addf %84, %93 : vector<4x256xf32>
    %c6 = arith.constant 6 : index
    %95 = memref.load %arg3[%c6] : memref<98xf32, #tpu.memory_space<smem>>
    %c55 = arith.constant 55 : index
    %96 = memref.load %arg3[%c55] : memref<98xf32, #tpu.memory_space<smem>>
    %97 = arith.subf %96, %95 : f32
    %98 = vector.broadcast %97 : f32 to vector<4x1xf32>
    %99 = arith.mulf %98, %10 : vector<4x1xf32>
    %100 = vector.broadcast %95 : f32 to vector<4x1xf32>
    %101 = arith.addf %100, %99 : vector<4x1xf32>
    %102 = vector.broadcast %101 : vector<4x1xf32> to vector<4x256xf32>
    %103 = arith.mulf %102, %34 : vector<4x256xf32>
    %104 = arith.addf %94, %103 : vector<4x256xf32>
    %c48_i32 = arith.constant 48 : i32
    %105 = tpu.dynamic_rotate %104 by %c48_i32 dim 1 : vector<4x256xf32>, i32 -> vector<4x256xf32>
    %c0_13 = arith.constant 0 : index
    %c0_14 = arith.constant 0 : index
    %106 = vector.load %arg2[%c0_13, %c0_14] : memref<14x256xf32, #tpu.memory_space<vmem>>, vector<1x256xf32>
    %107 = vector.broadcast %106 : vector<1x256xf32> to vector<4x256xf32>
    %108 = arith.mulf %105, %107 : vector<4x256xf32>
    %109 = arith.addf %35, %108 : vector<4x256xf32>
    %c7_15 = arith.constant 7 : index
    %110 = memref.load %arg3[%c7_15] : memref<98xf32, #tpu.memory_space<smem>>
    %c56 = arith.constant 56 : index
    %111 = memref.load %arg3[%c56] : memref<98xf32, #tpu.memory_space<smem>>
    %112 = arith.subf %111, %110 : f32
    %113 = vector.broadcast %112 : f32 to vector<4x1xf32>
    %114 = arith.mulf %113, %10 : vector<4x1xf32>
    %115 = vector.broadcast %110 : f32 to vector<4x1xf32>
    %116 = arith.addf %115, %114 : vector<4x1xf32>
    %117 = vector.broadcast %116 : vector<4x1xf32> to vector<4x256xf32>
    %118 = arith.mulf %117, %14 : vector<4x256xf32>
    %c8_16 = arith.constant 8 : index
    %119 = memref.load %arg3[%c8_16] : memref<98xf32, #tpu.memory_space<smem>>
    %c57 = arith.constant 57 : index
    %120 = memref.load %arg3[%c57] : memref<98xf32, #tpu.memory_space<smem>>
    %121 = arith.subf %120, %119 : f32
    %122 = vector.broadcast %121 : f32 to vector<4x1xf32>
    %123 = arith.mulf %122, %10 : vector<4x1xf32>
    %124 = vector.broadcast %119 : f32 to vector<4x1xf32>
    %125 = arith.addf %124, %123 : vector<4x1xf32>
    %126 = vector.broadcast %125 : vector<4x1xf32> to vector<4x256xf32>
    %127 = arith.mulf %126, %18 : vector<4x256xf32>
    %128 = arith.addf %118, %127 : vector<4x256xf32>
    %c9_17 = arith.constant 9 : index
    %129 = memref.load %arg3[%c9_17] : memref<98xf32, #tpu.memory_space<smem>>
    %c58 = arith.constant 58 : index
    %130 = memref.load %arg3[%c58] : memref<98xf32, #tpu.memory_space<smem>>
    %131 = arith.subf %130, %129 : f32
    %132 = vector.broadcast %131 : f32 to vector<4x1xf32>
    %133 = arith.mulf %132, %10 : vector<4x1xf32>
    %134 = vector.broadcast %129 : f32 to vector<4x1xf32>
    %135 = arith.addf %134, %133 : vector<4x1xf32>
    %136 = vector.broadcast %135 : vector<4x1xf32> to vector<4x256xf32>
    %137 = arith.mulf %136, %22 : vector<4x256xf32>
    %138 = arith.addf %128, %137 : vector<4x256xf32>
    %c10 = arith.constant 10 : index
    %139 = memref.load %arg3[%c10] : memref<98xf32, #tpu.memory_space<smem>>
    %c59 = arith.constant 59 : index
    %140 = memref.load %arg3[%c59] : memref<98xf32, #tpu.memory_space<smem>>
    %141 = arith.subf %140, %139 : f32
    %142 = vector.broadcast %141 : f32 to vector<4x1xf32>
    %143 = arith.mulf %142, %10 : vector<4x1xf32>
    %144 = vector.broadcast %139 : f32 to vector<4x1xf32>
    %145 = arith.addf %144, %143 : vector<4x1xf32>
    %146 = vector.broadcast %145 : vector<4x1xf32> to vector<4x256xf32>
    %147 = arith.mulf %146, %5 : vector<4x256xf32>
    %148 = arith.addf %138, %147 : vector<4x256xf32>
    %c11_18 = arith.constant 11 : index
    %149 = memref.load %arg3[%c11_18] : memref<98xf32, #tpu.memory_space<smem>>
    %c60 = arith.constant 60 : index
    %150 = memref.load %arg3[%c60] : memref<98xf32, #tpu.memory_space<smem>>
    %151 = arith.subf %150, %149 : f32
    %152 = vector.broadcast %151 : f32 to vector<4x1xf32>
    %153 = arith.mulf %152, %10 : vector<4x1xf32>
    %154 = vector.broadcast %149 : f32 to vector<4x1xf32>
    %155 = arith.addf %154, %153 : vector<4x1xf32>
    %156 = vector.broadcast %155 : vector<4x1xf32> to vector<4x256xf32>
    %157 = arith.mulf %156, %26 : vector<4x256xf32>
    %158 = arith.addf %148, %157 : vector<4x256xf32>
    %c12_19 = arith.constant 12 : index
    %159 = memref.load %arg3[%c12_19] : memref<98xf32, #tpu.memory_space<smem>>
    %c61 = arith.constant 61 : index
    %160 = memref.load %arg3[%c61] : memref<98xf32, #tpu.memory_space<smem>>
    %161 = arith.subf %160, %159 : f32
    %162 = vector.broadcast %161 : f32 to vector<4x1xf32>
    %163 = arith.mulf %162, %10 : vector<4x1xf32>
    %164 = vector.broadcast %159 : f32 to vector<4x1xf32>
    %165 = arith.addf %164, %163 : vector<4x1xf32>
    %166 = vector.broadcast %165 : vector<4x1xf32> to vector<4x256xf32>
    %167 = arith.mulf %166, %30 : vector<4x256xf32>
    %168 = arith.addf %158, %167 : vector<4x256xf32>
    %c13_20 = arith.constant 13 : index
    %169 = memref.load %arg3[%c13_20] : memref<98xf32, #tpu.memory_space<smem>>
    %c62 = arith.constant 62 : index
    %170 = memref.load %arg3[%c62] : memref<98xf32, #tpu.memory_space<smem>>
    %171 = arith.subf %170, %169 : f32
    %172 = vector.broadcast %171 : f32 to vector<4x1xf32>
    %173 = arith.mulf %172, %10 : vector<4x1xf32>
    %174 = vector.broadcast %169 : f32 to vector<4x1xf32>
    %175 = arith.addf %174, %173 : vector<4x1xf32>
    %176 = vector.broadcast %175 : vector<4x1xf32> to vector<4x256xf32>
    %177 = arith.mulf %176, %34 : vector<4x256xf32>
    %178 = arith.addf %168, %177 : vector<4x256xf32>
    %c32_i32 = arith.constant 32 : i32
    %179 = tpu.dynamic_rotate %178 by %c32_i32 dim 1 : vector<4x256xf32>, i32 -> vector<4x256xf32>
    %c1_21 = arith.constant 1 : index
    %c0_22 = arith.constant 0 : index
    %180 = vector.load %arg2[%c1_21, %c0_22] : memref<14x256xf32, #tpu.memory_space<vmem>>, vector<1x256xf32>
    %181 = vector.broadcast %180 : vector<1x256xf32> to vector<4x256xf32>
    %182 = arith.mulf %179, %181 : vector<4x256xf32>
    %183 = arith.addf %109, %182 : vector<4x256xf32>
    %c14 = arith.constant 14 : index
    %184 = memref.load %arg3[%c14] : memref<98xf32, #tpu.memory_space<smem>>
    %c63 = arith.constant 63 : index
    %185 = memref.load %arg3[%c63] : memref<98xf32, #tpu.memory_space<smem>>
    %186 = arith.subf %185, %184 : f32
    %187 = vector.broadcast %186 : f32 to vector<4x1xf32>
    %188 = arith.mulf %187, %10 : vector<4x1xf32>
    %189 = vector.broadcast %184 : f32 to vector<4x1xf32>
    %190 = arith.addf %189, %188 : vector<4x1xf32>
    %191 = vector.broadcast %190 : vector<4x1xf32> to vector<4x256xf32>
    %192 = arith.mulf %191, %14 : vector<4x256xf32>
    %c15 = arith.constant 15 : index
    %193 = memref.load %arg3[%c15] : memref<98xf32, #tpu.memory_space<smem>>
    %c64 = arith.constant 64 : index
    %194 = memref.load %arg3[%c64] : memref<98xf32, #tpu.memory_space<smem>>
    %195 = arith.subf %194, %193 : f32
    %196 = vector.broadcast %195 : f32 to vector<4x1xf32>
    %197 = arith.mulf %196, %10 : vector<4x1xf32>
    %198 = vector.broadcast %193 : f32 to vector<4x1xf32>
    %199 = arith.addf %198, %197 : vector<4x1xf32>
    %200 = vector.broadcast %199 : vector<4x1xf32> to vector<4x256xf32>
    %201 = arith.mulf %200, %18 : vector<4x256xf32>
    %202 = arith.addf %192, %201 : vector<4x256xf32>
    %c16 = arith.constant 16 : index
    %203 = memref.load %arg3[%c16] : memref<98xf32, #tpu.memory_space<smem>>
    %c65 = arith.constant 65 : index
    %204 = memref.load %arg3[%c65] : memref<98xf32, #tpu.memory_space<smem>>
    %205 = arith.subf %204, %203 : f32
    %206 = vector.broadcast %205 : f32 to vector<4x1xf32>
    %207 = arith.mulf %206, %10 : vector<4x1xf32>
    %208 = vector.broadcast %203 : f32 to vector<4x1xf32>
    %209 = arith.addf %208, %207 : vector<4x1xf32>
    %210 = vector.broadcast %209 : vector<4x1xf32> to vector<4x256xf32>
    %211 = arith.mulf %210, %22 : vector<4x256xf32>
    %212 = arith.addf %202, %211 : vector<4x256xf32>
    %c17 = arith.constant 17 : index
    %213 = memref.load %arg3[%c17] : memref<98xf32, #tpu.memory_space<smem>>
    %c66 = arith.constant 66 : index
    %214 = memref.load %arg3[%c66] : memref<98xf32, #tpu.memory_space<smem>>
    %215 = arith.subf %214, %213 : f32
    %216 = vector.broadcast %215 : f32 to vector<4x1xf32>
    %217 = arith.mulf %216, %10 : vector<4x1xf32>
    %218 = vector.broadcast %213 : f32 to vector<4x1xf32>
    %219 = arith.addf %218, %217 : vector<4x1xf32>
    %220 = vector.broadcast %219 : vector<4x1xf32> to vector<4x256xf32>
    %221 = arith.mulf %220, %5 : vector<4x256xf32>
    %222 = arith.addf %212, %221 : vector<4x256xf32>
    %c18 = arith.constant 18 : index
    %223 = memref.load %arg3[%c18] : memref<98xf32, #tpu.memory_space<smem>>
    %c67 = arith.constant 67 : index
    %224 = memref.load %arg3[%c67] : memref<98xf32, #tpu.memory_space<smem>>
    %225 = arith.subf %224, %223 : f32
    %226 = vector.broadcast %225 : f32 to vector<4x1xf32>
    %227 = arith.mulf %226, %10 : vector<4x1xf32>
    %228 = vector.broadcast %223 : f32 to vector<4x1xf32>
    %229 = arith.addf %228, %227 : vector<4x1xf32>
    %230 = vector.broadcast %229 : vector<4x1xf32> to vector<4x256xf32>
    %231 = arith.mulf %230, %26 : vector<4x256xf32>
    %232 = arith.addf %222, %231 : vector<4x256xf32>
    %c19 = arith.constant 19 : index
    %233 = memref.load %arg3[%c19] : memref<98xf32, #tpu.memory_space<smem>>
    %c68 = arith.constant 68 : index
    %234 = memref.load %arg3[%c68] : memref<98xf32, #tpu.memory_space<smem>>
    %235 = arith.subf %234, %233 : f32
    %236 = vector.broadcast %235 : f32 to vector<4x1xf32>
    %237 = arith.mulf %236, %10 : vector<4x1xf32>
    %238 = vector.broadcast %233 : f32 to vector<4x1xf32>
    %239 = arith.addf %238, %237 : vector<4x1xf32>
    %240 = vector.broadcast %239 : vector<4x1xf32> to vector<4x256xf32>
    %241 = arith.mulf %240, %30 : vector<4x256xf32>
    %242 = arith.addf %232, %241 : vector<4x256xf32>
    %c20 = arith.constant 20 : index
    %243 = memref.load %arg3[%c20] : memref<98xf32, #tpu.memory_space<smem>>
    %c69 = arith.constant 69 : index
    %244 = memref.load %arg3[%c69] : memref<98xf32, #tpu.memory_space<smem>>
    %245 = arith.subf %244, %243 : f32
    %246 = vector.broadcast %245 : f32 to vector<4x1xf32>
    %247 = arith.mulf %246, %10 : vector<4x1xf32>
    %248 = vector.broadcast %243 : f32 to vector<4x1xf32>
    %249 = arith.addf %248, %247 : vector<4x1xf32>
    %250 = vector.broadcast %249 : vector<4x1xf32> to vector<4x256xf32>
    %251 = arith.mulf %250, %34 : vector<4x256xf32>
    %252 = arith.addf %242, %251 : vector<4x256xf32>
    %c16_i32 = arith.constant 16 : i32
    %253 = tpu.dynamic_rotate %252 by %c16_i32 dim 1 : vector<4x256xf32>, i32 -> vector<4x256xf32>
    %c2_23 = arith.constant 2 : index
    %c0_24 = arith.constant 0 : index
    %254 = vector.load %arg2[%c2_23, %c0_24] : memref<14x256xf32, #tpu.memory_space<vmem>>, vector<1x256xf32>
    %255 = vector.broadcast %254 : vector<1x256xf32> to vector<4x256xf32>
    %256 = arith.mulf %253, %255 : vector<4x256xf32>
    %257 = arith.addf %183, %256 : vector<4x256xf32>
    %c21 = arith.constant 21 : index
    %258 = memref.load %arg3[%c21] : memref<98xf32, #tpu.memory_space<smem>>
    %c70 = arith.constant 70 : index
    %259 = memref.load %arg3[%c70] : memref<98xf32, #tpu.memory_space<smem>>
    %260 = arith.subf %259, %258 : f32
    %261 = vector.broadcast %260 : f32 to vector<4x1xf32>
    %262 = arith.mulf %261, %10 : vector<4x1xf32>
    %263 = vector.broadcast %258 : f32 to vector<4x1xf32>
    %264 = arith.addf %263, %262 : vector<4x1xf32>
    %265 = vector.broadcast %264 : vector<4x1xf32> to vector<4x256xf32>
    %266 = arith.mulf %265, %14 : vector<4x256xf32>
    %c22 = arith.constant 22 : index
    %267 = memref.load %arg3[%c22] : memref<98xf32, #tpu.memory_space<smem>>
    %c71 = arith.constant 71 : index
    %268 = memref.load %arg3[%c71] : memref<98xf32, #tpu.memory_space<smem>>
    %269 = arith.subf %268, %267 : f32
    %270 = vector.broadcast %269 : f32 to vector<4x1xf32>
    %271 = arith.mulf %270, %10 : vector<4x1xf32>
    %272 = vector.broadcast %267 : f32 to vector<4x1xf32>
    %273 = arith.addf %272, %271 : vector<4x1xf32>
    %274 = vector.broadcast %273 : vector<4x1xf32> to vector<4x256xf32>
    %275 = arith.mulf %274, %18 : vector<4x256xf32>
    %276 = arith.addf %266, %275 : vector<4x256xf32>
    %c23 = arith.constant 23 : index
    %277 = memref.load %arg3[%c23] : memref<98xf32, #tpu.memory_space<smem>>
    %c72 = arith.constant 72 : index
    %278 = memref.load %arg3[%c72] : memref<98xf32, #tpu.memory_space<smem>>
    %279 = arith.subf %278, %277 : f32
    %280 = vector.broadcast %279 : f32 to vector<4x1xf32>
    %281 = arith.mulf %280, %10 : vector<4x1xf32>
    %282 = vector.broadcast %277 : f32 to vector<4x1xf32>
    %283 = arith.addf %282, %281 : vector<4x1xf32>
    %284 = vector.broadcast %283 : vector<4x1xf32> to vector<4x256xf32>
    %285 = arith.mulf %284, %22 : vector<4x256xf32>
    %286 = arith.addf %276, %285 : vector<4x256xf32>
    %c24 = arith.constant 24 : index
    %287 = memref.load %arg3[%c24] : memref<98xf32, #tpu.memory_space<smem>>
    %c73 = arith.constant 73 : index
    %288 = memref.load %arg3[%c73] : memref<98xf32, #tpu.memory_space<smem>>
    %289 = arith.subf %288, %287 : f32
    %290 = vector.broadcast %289 : f32 to vector<4x1xf32>
    %291 = arith.mulf %290, %10 : vector<4x1xf32>
    %292 = vector.broadcast %287 : f32 to vector<4x1xf32>
    %293 = arith.addf %292, %291 : vector<4x1xf32>
    %294 = vector.broadcast %293 : vector<4x1xf32> to vector<4x256xf32>
    %295 = arith.mulf %294, %5 : vector<4x256xf32>
    %296 = arith.addf %286, %295 : vector<4x256xf32>
    %c25 = arith.constant 25 : index
    %297 = memref.load %arg3[%c25] : memref<98xf32, #tpu.memory_space<smem>>
    %c74 = arith.constant 74 : index
    %298 = memref.load %arg3[%c74] : memref<98xf32, #tpu.memory_space<smem>>
    %299 = arith.subf %298, %297 : f32
    %300 = vector.broadcast %299 : f32 to vector<4x1xf32>
    %301 = arith.mulf %300, %10 : vector<4x1xf32>
    %302 = vector.broadcast %297 : f32 to vector<4x1xf32>
    %303 = arith.addf %302, %301 : vector<4x1xf32>
    %304 = vector.broadcast %303 : vector<4x1xf32> to vector<4x256xf32>
    %305 = arith.mulf %304, %26 : vector<4x256xf32>
    %306 = arith.addf %296, %305 : vector<4x256xf32>
    %c26 = arith.constant 26 : index
    %307 = memref.load %arg3[%c26] : memref<98xf32, #tpu.memory_space<smem>>
    %c75 = arith.constant 75 : index
    %308 = memref.load %arg3[%c75] : memref<98xf32, #tpu.memory_space<smem>>
    %309 = arith.subf %308, %307 : f32
    %310 = vector.broadcast %309 : f32 to vector<4x1xf32>
    %311 = arith.mulf %310, %10 : vector<4x1xf32>
    %312 = vector.broadcast %307 : f32 to vector<4x1xf32>
    %313 = arith.addf %312, %311 : vector<4x1xf32>
    %314 = vector.broadcast %313 : vector<4x1xf32> to vector<4x256xf32>
    %315 = arith.mulf %314, %30 : vector<4x256xf32>
    %316 = arith.addf %306, %315 : vector<4x256xf32>
    %c27 = arith.constant 27 : index
    %317 = memref.load %arg3[%c27] : memref<98xf32, #tpu.memory_space<smem>>
    %c76 = arith.constant 76 : index
    %318 = memref.load %arg3[%c76] : memref<98xf32, #tpu.memory_space<smem>>
    %319 = arith.subf %318, %317 : f32
    %320 = vector.broadcast %319 : f32 to vector<4x1xf32>
    %321 = arith.mulf %320, %10 : vector<4x1xf32>
    %322 = vector.broadcast %317 : f32 to vector<4x1xf32>
    %323 = arith.addf %322, %321 : vector<4x1xf32>
    %324 = vector.broadcast %323 : vector<4x1xf32> to vector<4x256xf32>
    %325 = arith.mulf %324, %34 : vector<4x256xf32>
    %326 = arith.addf %316, %325 : vector<4x256xf32>
    %327 = arith.addf %257, %326 : vector<4x256xf32>
    %c28 = arith.constant 28 : index
    %328 = memref.load %arg3[%c28] : memref<98xf32, #tpu.memory_space<smem>>
    %c77 = arith.constant 77 : index
    %329 = memref.load %arg3[%c77] : memref<98xf32, #tpu.memory_space<smem>>
    %330 = arith.subf %329, %328 : f32
    %331 = vector.broadcast %330 : f32 to vector<4x1xf32>
    %332 = arith.mulf %331, %10 : vector<4x1xf32>
    %333 = vector.broadcast %328 : f32 to vector<4x1xf32>
    %334 = arith.addf %333, %332 : vector<4x1xf32>
    %335 = vector.broadcast %334 : vector<4x1xf32> to vector<4x256xf32>
    %336 = arith.mulf %335, %14 : vector<4x256xf32>
    %c29 = arith.constant 29 : index
    %337 = memref.load %arg3[%c29] : memref<98xf32, #tpu.memory_space<smem>>
    %c78 = arith.constant 78 : index
    %338 = memref.load %arg3[%c78] : memref<98xf32, #tpu.memory_space<smem>>
    %339 = arith.subf %338, %337 : f32
    %340 = vector.broadcast %339 : f32 to vector<4x1xf32>
    %341 = arith.mulf %340, %10 : vector<4x1xf32>
    %342 = vector.broadcast %337 : f32 to vector<4x1xf32>
    %343 = arith.addf %342, %341 : vector<4x1xf32>
    %344 = vector.broadcast %343 : vector<4x1xf32> to vector<4x256xf32>
    %345 = arith.mulf %344, %18 : vector<4x256xf32>
    %346 = arith.addf %336, %345 : vector<4x256xf32>
    %c30 = arith.constant 30 : index
    %347 = memref.load %arg3[%c30] : memref<98xf32, #tpu.memory_space<smem>>
    %c79 = arith.constant 79 : index
    %348 = memref.load %arg3[%c79] : memref<98xf32, #tpu.memory_space<smem>>
    %349 = arith.subf %348, %347 : f32
    %350 = vector.broadcast %349 : f32 to vector<4x1xf32>
    %351 = arith.mulf %350, %10 : vector<4x1xf32>
    %352 = vector.broadcast %347 : f32 to vector<4x1xf32>
    %353 = arith.addf %352, %351 : vector<4x1xf32>
    %354 = vector.broadcast %353 : vector<4x1xf32> to vector<4x256xf32>
    %355 = arith.mulf %354, %22 : vector<4x256xf32>
    %356 = arith.addf %346, %355 : vector<4x256xf32>
    %c31 = arith.constant 31 : index
    %357 = memref.load %arg3[%c31] : memref<98xf32, #tpu.memory_space<smem>>
    %c80 = arith.constant 80 : index
    %358 = memref.load %arg3[%c80] : memref<98xf32, #tpu.memory_space<smem>>
    %359 = arith.subf %358, %357 : f32
    %360 = vector.broadcast %359 : f32 to vector<4x1xf32>
    %361 = arith.mulf %360, %10 : vector<4x1xf32>
    %362 = vector.broadcast %357 : f32 to vector<4x1xf32>
    %363 = arith.addf %362, %361 : vector<4x1xf32>
    %364 = vector.broadcast %363 : vector<4x1xf32> to vector<4x256xf32>
    %365 = arith.mulf %364, %5 : vector<4x256xf32>
    %366 = arith.addf %356, %365 : vector<4x256xf32>
    %c32 = arith.constant 32 : index
    %367 = memref.load %arg3[%c32] : memref<98xf32, #tpu.memory_space<smem>>
    %c81 = arith.constant 81 : index
    %368 = memref.load %arg3[%c81] : memref<98xf32, #tpu.memory_space<smem>>
    %369 = arith.subf %368, %367 : f32
    %370 = vector.broadcast %369 : f32 to vector<4x1xf32>
    %371 = arith.mulf %370, %10 : vector<4x1xf32>
    %372 = vector.broadcast %367 : f32 to vector<4x1xf32>
    %373 = arith.addf %372, %371 : vector<4x1xf32>
    %374 = vector.broadcast %373 : vector<4x1xf32> to vector<4x256xf32>
    %375 = arith.mulf %374, %26 : vector<4x256xf32>
    %376 = arith.addf %366, %375 : vector<4x256xf32>
    %c33 = arith.constant 33 : index
    %377 = memref.load %arg3[%c33] : memref<98xf32, #tpu.memory_space<smem>>
    %c82 = arith.constant 82 : index
    %378 = memref.load %arg3[%c82] : memref<98xf32, #tpu.memory_space<smem>>
    %379 = arith.subf %378, %377 : f32
    %380 = vector.broadcast %379 : f32 to vector<4x1xf32>
    %381 = arith.mulf %380, %10 : vector<4x1xf32>
    %382 = vector.broadcast %377 : f32 to vector<4x1xf32>
    %383 = arith.addf %382, %381 : vector<4x1xf32>
    %384 = vector.broadcast %383 : vector<4x1xf32> to vector<4x256xf32>
    %385 = arith.mulf %384, %30 : vector<4x256xf32>
    %386 = arith.addf %376, %385 : vector<4x256xf32>
    %c34 = arith.constant 34 : index
    %387 = memref.load %arg3[%c34] : memref<98xf32, #tpu.memory_space<smem>>
    %c83 = arith.constant 83 : index
    %388 = memref.load %arg3[%c83] : memref<98xf32, #tpu.memory_space<smem>>
    %389 = arith.subf %388, %387 : f32
    %390 = vector.broadcast %389 : f32 to vector<4x1xf32>
    %391 = arith.mulf %390, %10 : vector<4x1xf32>
    %392 = vector.broadcast %387 : f32 to vector<4x1xf32>
    %393 = arith.addf %392, %391 : vector<4x1xf32>
    %394 = vector.broadcast %393 : vector<4x1xf32> to vector<4x256xf32>
    %395 = arith.mulf %394, %34 : vector<4x256xf32>
    %396 = arith.addf %386, %395 : vector<4x256xf32>
    %c240_i32 = arith.constant 240 : i32
    %397 = tpu.dynamic_rotate %396 by %c240_i32 dim 1 : vector<4x256xf32>, i32 -> vector<4x256xf32>
    %c4_25 = arith.constant 4 : index
    %c0_26 = arith.constant 0 : index
    %398 = vector.load %arg2[%c4_25, %c0_26] : memref<14x256xf32, #tpu.memory_space<vmem>>, vector<1x256xf32>
    %399 = vector.broadcast %398 : vector<1x256xf32> to vector<4x256xf32>
    %400 = arith.mulf %397, %399 : vector<4x256xf32>
    %401 = arith.addf %327, %400 : vector<4x256xf32>
    %c35 = arith.constant 35 : index
    %402 = memref.load %arg3[%c35] : memref<98xf32, #tpu.memory_space<smem>>
    %c84 = arith.constant 84 : index
    %403 = memref.load %arg3[%c84] : memref<98xf32, #tpu.memory_space<smem>>
    %404 = arith.subf %403, %402 : f32
    %405 = vector.broadcast %404 : f32 to vector<4x1xf32>
    %406 = arith.mulf %405, %10 : vector<4x1xf32>
    %407 = vector.broadcast %402 : f32 to vector<4x1xf32>
    %408 = arith.addf %407, %406 : vector<4x1xf32>
    %409 = vector.broadcast %408 : vector<4x1xf32> to vector<4x256xf32>
    %410 = arith.mulf %409, %14 : vector<4x256xf32>
    %c36 = arith.constant 36 : index
    %411 = memref.load %arg3[%c36] : memref<98xf32, #tpu.memory_space<smem>>
    %c85 = arith.constant 85 : index
    %412 = memref.load %arg3[%c85] : memref<98xf32, #tpu.memory_space<smem>>
    %413 = arith.subf %412, %411 : f32
    %414 = vector.broadcast %413 : f32 to vector<4x1xf32>
    %415 = arith.mulf %414, %10 : vector<4x1xf32>
    %416 = vector.broadcast %411 : f32 to vector<4x1xf32>
    %417 = arith.addf %416, %415 : vector<4x1xf32>
    %418 = vector.broadcast %417 : vector<4x1xf32> to vector<4x256xf32>
    %419 = arith.mulf %418, %18 : vector<4x256xf32>
    %420 = arith.addf %410, %419 : vector<4x256xf32>
    %c37 = arith.constant 37 : index
    %421 = memref.load %arg3[%c37] : memref<98xf32, #tpu.memory_space<smem>>
    %c86 = arith.constant 86 : index
    %422 = memref.load %arg3[%c86] : memref<98xf32, #tpu.memory_space<smem>>
    %423 = arith.subf %422, %421 : f32
    %424 = vector.broadcast %423 : f32 to vector<4x1xf32>
    %425 = arith.mulf %424, %10 : vector<4x1xf32>
    %426 = vector.broadcast %421 : f32 to vector<4x1xf32>
    %427 = arith.addf %426, %425 : vector<4x1xf32>
    %428 = vector.broadcast %427 : vector<4x1xf32> to vector<4x256xf32>
    %429 = arith.mulf %428, %22 : vector<4x256xf32>
    %430 = arith.addf %420, %429 : vector<4x256xf32>
    %c38 = arith.constant 38 : index
    %431 = memref.load %arg3[%c38] : memref<98xf32, #tpu.memory_space<smem>>
    %c87 = arith.constant 87 : index
    %432 = memref.load %arg3[%c87] : memref<98xf32, #tpu.memory_space<smem>>
    %433 = arith.subf %432, %431 : f32
    %434 = vector.broadcast %433 : f32 to vector<4x1xf32>
    %435 = arith.mulf %434, %10 : vector<4x1xf32>
    %436 = vector.broadcast %431 : f32 to vector<4x1xf32>
    %437 = arith.addf %436, %435 : vector<4x1xf32>
    %438 = vector.broadcast %437 : vector<4x1xf32> to vector<4x256xf32>
    %439 = arith.mulf %438, %5 : vector<4x256xf32>
    %440 = arith.addf %430, %439 : vector<4x256xf32>
    %c39 = arith.constant 39 : index
    %441 = memref.load %arg3[%c39] : memref<98xf32, #tpu.memory_space<smem>>
    %c88 = arith.constant 88 : index
    %442 = memref.load %arg3[%c88] : memref<98xf32, #tpu.memory_space<smem>>
    %443 = arith.subf %442, %441 : f32
    %444 = vector.broadcast %443 : f32 to vector<4x1xf32>
    %445 = arith.mulf %444, %10 : vector<4x1xf32>
    %446 = vector.broadcast %441 : f32 to vector<4x1xf32>
    %447 = arith.addf %446, %445 : vector<4x1xf32>
    %448 = vector.broadcast %447 : vector<4x1xf32> to vector<4x256xf32>
    %449 = arith.mulf %448, %26 : vector<4x256xf32>
    %450 = arith.addf %440, %449 : vector<4x256xf32>
    %c40 = arith.constant 40 : index
    %451 = memref.load %arg3[%c40] : memref<98xf32, #tpu.memory_space<smem>>
    %c89 = arith.constant 89 : index
    %452 = memref.load %arg3[%c89] : memref<98xf32, #tpu.memory_space<smem>>
    %453 = arith.subf %452, %451 : f32
    %454 = vector.broadcast %453 : f32 to vector<4x1xf32>
    %455 = arith.mulf %454, %10 : vector<4x1xf32>
    %456 = vector.broadcast %451 : f32 to vector<4x1xf32>
    %457 = arith.addf %456, %455 : vector<4x1xf32>
    %458 = vector.broadcast %457 : vector<4x1xf32> to vector<4x256xf32>
    %459 = arith.mulf %458, %30 : vector<4x256xf32>
    %460 = arith.addf %450, %459 : vector<4x256xf32>
    %c41 = arith.constant 41 : index
    %461 = memref.load %arg3[%c41] : memref<98xf32, #tpu.memory_space<smem>>
    %c90 = arith.constant 90 : index
    %462 = memref.load %arg3[%c90] : memref<98xf32, #tpu.memory_space<smem>>
    %463 = arith.subf %462, %461 : f32
    %464 = vector.broadcast %463 : f32 to vector<4x1xf32>
    %465 = arith.mulf %464, %10 : vector<4x1xf32>
    %466 = vector.broadcast %461 : f32 to vector<4x1xf32>
    %467 = arith.addf %466, %465 : vector<4x1xf32>
    %468 = vector.broadcast %467 : vector<4x1xf32> to vector<4x256xf32>
    %469 = arith.mulf %468, %34 : vector<4x256xf32>
    %470 = arith.addf %460, %469 : vector<4x256xf32>
    %c224_i32 = arith.constant 224 : i32
    %471 = tpu.dynamic_rotate %470 by %c224_i32 dim 1 : vector<4x256xf32>, i32 -> vector<4x256xf32>
    %c5_27 = arith.constant 5 : index
    %c0_28 = arith.constant 0 : index
    %472 = vector.load %arg2[%c5_27, %c0_28] : memref<14x256xf32, #tpu.memory_space<vmem>>, vector<1x256xf32>
    %473 = vector.broadcast %472 : vector<1x256xf32> to vector<4x256xf32>
    %474 = arith.mulf %471, %473 : vector<4x256xf32>
    %475 = arith.addf %401, %474 : vector<4x256xf32>
    %c42 = arith.constant 42 : index
    %476 = memref.load %arg3[%c42] : memref<98xf32, #tpu.memory_space<smem>>
    %c91 = arith.constant 91 : index
    %477 = memref.load %arg3[%c91] : memref<98xf32, #tpu.memory_space<smem>>
    %478 = arith.subf %477, %476 : f32
    %479 = vector.broadcast %478 : f32 to vector<4x1xf32>
    %480 = arith.mulf %479, %10 : vector<4x1xf32>
    %481 = vector.broadcast %476 : f32 to vector<4x1xf32>
    %482 = arith.addf %481, %480 : vector<4x1xf32>
    %483 = vector.broadcast %482 : vector<4x1xf32> to vector<4x256xf32>
    %484 = arith.mulf %483, %14 : vector<4x256xf32>
    %c43 = arith.constant 43 : index
    %485 = memref.load %arg3[%c43] : memref<98xf32, #tpu.memory_space<smem>>
    %c92 = arith.constant 92 : index
    %486 = memref.load %arg3[%c92] : memref<98xf32, #tpu.memory_space<smem>>
    %487 = arith.subf %486, %485 : f32
    %488 = vector.broadcast %487 : f32 to vector<4x1xf32>
    %489 = arith.mulf %488, %10 : vector<4x1xf32>
    %490 = vector.broadcast %485 : f32 to vector<4x1xf32>
    %491 = arith.addf %490, %489 : vector<4x1xf32>
    %492 = vector.broadcast %491 : vector<4x1xf32> to vector<4x256xf32>
    %493 = arith.mulf %492, %18 : vector<4x256xf32>
    %494 = arith.addf %484, %493 : vector<4x256xf32>
    %c44 = arith.constant 44 : index
    %495 = memref.load %arg3[%c44] : memref<98xf32, #tpu.memory_space<smem>>
    %c93 = arith.constant 93 : index
    %496 = memref.load %arg3[%c93] : memref<98xf32, #tpu.memory_space<smem>>
    %497 = arith.subf %496, %495 : f32
    %498 = vector.broadcast %497 : f32 to vector<4x1xf32>
    %499 = arith.mulf %498, %10 : vector<4x1xf32>
    %500 = vector.broadcast %495 : f32 to vector<4x1xf32>
    %501 = arith.addf %500, %499 : vector<4x1xf32>
    %502 = vector.broadcast %501 : vector<4x1xf32> to vector<4x256xf32>
    %503 = arith.mulf %502, %22 : vector<4x256xf32>
    %504 = arith.addf %494, %503 : vector<4x256xf32>
    %c45 = arith.constant 45 : index
    %505 = memref.load %arg3[%c45] : memref<98xf32, #tpu.memory_space<smem>>
    %c94 = arith.constant 94 : index
    %506 = memref.load %arg3[%c94] : memref<98xf32, #tpu.memory_space<smem>>
    %507 = arith.subf %506, %505 : f32
    %508 = vector.broadcast %507 : f32 to vector<4x1xf32>
    %509 = arith.mulf %508, %10 : vector<4x1xf32>
    %510 = vector.broadcast %505 : f32 to vector<4x1xf32>
    %511 = arith.addf %510, %509 : vector<4x1xf32>
    %512 = vector.broadcast %511 : vector<4x1xf32> to vector<4x256xf32>
    %513 = arith.mulf %512, %5 : vector<4x256xf32>
    %514 = arith.addf %504, %513 : vector<4x256xf32>
    %c46 = arith.constant 46 : index
    %515 = memref.load %arg3[%c46] : memref<98xf32, #tpu.memory_space<smem>>
    %c95 = arith.constant 95 : index
    %516 = memref.load %arg3[%c95] : memref<98xf32, #tpu.memory_space<smem>>
    %517 = arith.subf %516, %515 : f32
    %518 = vector.broadcast %517 : f32 to vector<4x1xf32>
    %519 = arith.mulf %518, %10 : vector<4x1xf32>
    %520 = vector.broadcast %515 : f32 to vector<4x1xf32>
    %521 = arith.addf %520, %519 : vector<4x1xf32>
    %522 = vector.broadcast %521 : vector<4x1xf32> to vector<4x256xf32>
    %523 = arith.mulf %522, %26 : vector<4x256xf32>
    %524 = arith.addf %514, %523 : vector<4x256xf32>
    %c47 = arith.constant 47 : index
    %525 = memref.load %arg3[%c47] : memref<98xf32, #tpu.memory_space<smem>>
    %c96 = arith.constant 96 : index
    %526 = memref.load %arg3[%c96] : memref<98xf32, #tpu.memory_space<smem>>
    %527 = arith.subf %526, %525 : f32
    %528 = vector.broadcast %527 : f32 to vector<4x1xf32>
    %529 = arith.mulf %528, %10 : vector<4x1xf32>
    %530 = vector.broadcast %525 : f32 to vector<4x1xf32>
    %531 = arith.addf %530, %529 : vector<4x1xf32>
    %532 = vector.broadcast %531 : vector<4x1xf32> to vector<4x256xf32>
    %533 = arith.mulf %532, %30 : vector<4x256xf32>
    %534 = arith.addf %524, %533 : vector<4x256xf32>
    %c48 = arith.constant 48 : index
    %535 = memref.load %arg3[%c48] : memref<98xf32, #tpu.memory_space<smem>>
    %c97 = arith.constant 97 : index
    %536 = memref.load %arg3[%c97] : memref<98xf32, #tpu.memory_space<smem>>
    %537 = arith.subf %536, %535 : f32
    %538 = vector.broadcast %537 : f32 to vector<4x1xf32>
    %539 = arith.mulf %538, %10 : vector<4x1xf32>
    %540 = vector.broadcast %535 : f32 to vector<4x1xf32>
    %541 = arith.addf %540, %539 : vector<4x1xf32>
    %542 = vector.broadcast %541 : vector<4x1xf32> to vector<4x256xf32>
    %543 = arith.mulf %542, %34 : vector<4x256xf32>
    %544 = arith.addf %534, %543 : vector<4x256xf32>
    %c208_i32 = arith.constant 208 : i32
    %545 = tpu.dynamic_rotate %544 by %c208_i32 dim 1 : vector<4x256xf32>, i32 -> vector<4x256xf32>
    %c6_29 = arith.constant 6 : index
    %c0_30 = arith.constant 0 : index
    %546 = vector.load %arg2[%c6_29, %c0_30] : memref<14x256xf32, #tpu.memory_space<vmem>>, vector<1x256xf32>
    %547 = vector.broadcast %546 : vector<1x256xf32> to vector<4x256xf32>
    %548 = arith.mulf %545, %547 : vector<4x256xf32>
    %549 = arith.addf %475, %548 : vector<4x256xf32>
    %550 = vector.extract_strided_slice %549 {offsets = [0, 0], sizes = [2, 256], strides = [1, 1]} : vector<4x256xf32> to vector<2x256xf32>
    %551 = vector.extract_strided_slice %549 {offsets = [2, 0], sizes = [2, 256], strides = [1, 1]} : vector<4x256xf32> to vector<2x256xf32>
    %552 = arith.addf %550, %551 : vector<2x256xf32>
    %c0_31 = arith.constant 0 : index
    %553 = memref.load %arg4[%c0_31] : memref<2xf32, #tpu.memory_space<smem>>
    %554 = vector.broadcast %553 : f32 to vector<2x256xf32>
    %555 = arith.mulf %552, %554 : vector<2x256xf32>
    %c1_32 = arith.constant 1 : index
    %556 = memref.load %arg4[%c1_32] : memref<2xf32, #tpu.memory_space<smem>>
    %557 = vector.broadcast %556 : f32 to vector<2x256xf32>
    %558 = arith.addf %555, %557 : vector<2x256xf32>
    %cst_33 = arith.constant 5.000000e-01 : f32
    %559 = vector.broadcast %cst_33 : f32 to vector<2x256xf32>
    %560 = arith.mulf %559, %558 : vector<2x256xf32>
    %561 = math.tanh %560 : vector<2x256xf32>
    %cst_34 = arith.constant 1.000000e+00 : f32
    %562 = vector.broadcast %cst_34 : f32 to vector<2x256xf32>
    %563 = arith.addf %561, %562 : vector<2x256xf32>
    %cst_35 = arith.constant 5.000000e-01 : f32
    %564 = vector.broadcast %cst_35 : f32 to vector<2x256xf32>
    %565 = arith.mulf %564, %563 : vector<2x256xf32>
    %c0_36 = arith.constant 0 : index
    %c0_37 = arith.constant 0 : index
    %c0_38 = arith.constant 0 : index
    %566 = vector.load %arg1[%c0_36, %c0_37, %c0_38] : memref<2x4x256xf32, #tpu.memory_space<vmem>>, vector<2x4x256xf32>
    %567 = vector.shape_cast %565 : vector<2x256xf32> to vector<2x1x256xf32>
    %568 = vector.broadcast %567 : vector<2x1x256xf32> to vector<2x4x256xf32>
    %569 = arith.mulf %566, %568 : vector<2x4x256xf32>
    %c0_39 = arith.constant 0 : index
    %c0_40 = arith.constant 0 : index
    %c0_41 = arith.constant 0 : index
    %570 = vector.load %arg5[%c0_39, %c0_40, %c0_41] : memref<2x4x256xf32, #tpu.memory_space<vmem>>, vector<2x4x256xf32>
    tpu.vector_store %arg5[%c0_39, %c0_40, %c0_41], %569 {strides = array<i32>} : memref<2x4x256xf32, #tpu.memory_space<vmem>>, vector<2x4x256xf32>,
    return
  }
  func.func @transform_0(%arg0: i32) -> (i32, i32, i32) {
    %c0_i32 = arith.constant 0 : i32
    %c0_i32_0 = arith.constant 0 : i32
    %c0_i32_1 = arith.constant 0 : i32
    return %arg0, %c0_i32, %c0_i32_0 : i32, i32, i32
  }
  func.func @transform_1(%arg0: i32) -> (i32, i32) {
    %c0_i32 = arith.constant 0 : i32
    %c0_i32_0 = arith.constant 0 : i32
    %c0_i32_1 = arith.constant 0 : i32
    return %c0_i32, %c0_i32_0 : i32, i32
  }
  func.func @transform_2(%arg0: i32) -> i32 {
    %c0_i32 = arith.constant 0 : i32
    %c0_i32_0 = arith.constant 0 : i32
    return %c0_i32 : i32
  }
  func.func @transform_3(%arg0: i32) -> i32 {
    %c0_i32 = arith.constant 0 : i32
    %c0_i32_0 = arith.constant 0 : i32
    return %c0_i32 : i32
  }
  func.func @transform_4(%arg0: i32) -> (i32, i32, i32) {
    %c0_i32 = arith.constant 0 : i32
    %c0_i32_0 = arith.constant 0 : i32
    %c0_i32_1 = arith.constant 0 : i32
    return %arg0, %c0_i32, %c0_i32_0 : i32, i32, i32
  }
}

</mosaic_0001>

<llo_original>
// kernel: tpu_custom_call.1
$region0: #{tpu_custom_call.1}
  #allocation0 [shape = 'u32[]', space=smem, size = 0x4, offset = 0x4, fixed_abs, tag = 'smem constant byte address 0x4 - core index']
  #allocation1 [shape = 'u32[144,128]{1,0:T(1,128)}', space=vmem, size = 0x12000, scoped, tag = 'internal scratch']
  %s0 = inlined_call_operand.hbm [shape: f32[2,4,256], index: 0, kind: input, shape index: {}]
  %s1 = inlined_call_operand.hbm [shape: f32[14,256], index: 1, kind: input, shape index: {}]
  %s2 = inlined_call_operand.vmem [shape: f32[98], index: 2, kind: input, shape index: {}]
  %s3 = inlined_call_operand.vmem [shape: f32[2], index: 3, kind: input, shape index: {}]
  %s4 = inlined_call_operand.hbm [shape: f32[2,4,256], index: 4, kind: output, shape index: {}]
  %s5 = sld [smem:[#allocation0]]
  $region42: #{tpu_custom_call.1} parent=0
    _
  %s7 = ssub.s32 1, %s5
  %s8 = scalar_select 0, %s7, %s5
  $region1: #{tpu_custom_call.1} parent=0
    #allocation2 [shape = 'u8[8192]{0}', space=vmem, size = 0x2000, scoped, tag = 'input window, operand 0, single buffered']
    #allocation3 [shape = 's32[1]{0}', space=sflag, size = 0x4, scoped, tag = 'scoped memory for tpu_custom_call.1']
    #allocation4 [shape = 's32[1]{0}', space=sflag, size = 0x4, scoped, tag = 'scoped memory for tpu_custom_call.1']
    #allocation5 [shape = 's32[1]{0}', space=sflag, size = 0x4, scoped, tag = 'scoped memory for tpu_custom_call.1']
    #allocation6 [shape = 'u8[16384]{0}', space=vmem, size = 0x4000, scoped, tag = 'input window, operand 1, single buffered']
    #allocation7 [shape = 's32[1]{0}', space=sflag, size = 0x4, scoped, tag = 'scoped memory for tpu_custom_call.1']
    #allocation8 [shape = 'u8[512]{0}', space=smem, size = 0x200, scoped, tag = 'input window, operand 2, single buffered']
    #allocation9 [shape = 'u8[512]{0}', space=smem, size = 0x200, scoped, tag = 'input window, operand 3, single buffered']
    #allocation10 [shape = 's32[1]{0}', space=sflag, size = 0x4, scoped, tag = 'scoped memory for tpu_custom_call.1']
    #allocation11 [shape = 'u8[8192]{0}', space=vmem, size = 0x2000, scoped, tag = 'output window, operand 0, single buffered']
    %9 = vsyncpa [#allocation3], 0
    %10 = vsyncpa [#allocation7], 0
    %11 = vsyncpa [#allocation5], 0
    %12 = vsyncpa [#allocation10], 0
    %13 = vsyncpa [#allocation4], 0
    // Predicated region
    $region2: #{tpu_custom_call.1} parent=1 // pred_check
      _
    $region3: #{tpu_custom_call.1} parent=1 // pred_check_branch
      %15 = sbr.rel (0) target = $region5
    $region4: #{tpu_custom_call.1} parent=1 // pred_region
      %s17 = ssub.s32 256, 256
      %18 = vsyncadd [#allocation3], %s17
      %s19 = sshll.u32 [#allocation2], 4
      %s20 = int_to_ptr.vmem [resolvable:$true] %s19
      %25 = dma.hbm_to_vmem [thread:$0]  %s0, 256, %s20, [#allocation3], 128, 128, 8
    $region5: #{tpu_custom_call.1} parent=1 // pred_fallthru
      _
    // Predicated region
    $region6: #{tpu_custom_call.1} parent=1 // pred_check
      _
    $region7: #{tpu_custom_call.1} parent=1 // pred_check_branch
      %27 = sbr.rel (0) target = $region9
    $region8: #{tpu_custom_call.1} parent=1 // pred_region
      %s29 = ssub.s32 512, 512
      %30 = vsyncadd [#allocation7], %s29
      %s31 = sshll.u32 [#allocation6], 4
      %s32 = int_to_ptr.vmem [resolvable:$true] %s31
      %37 = dma.hbm_to_vmem [thread:$0]  %s1, 512, %s32, [#allocation7], 256, 256, 16
    $region9: #{tpu_custom_call.1} parent=1 // pred_fallthru
      _
    // Predicated region
    $region10: #{tpu_custom_call.1} parent=1 // pred_check
      _
    $region11: #{tpu_custom_call.1} parent=1 // pred_check_branch
      %39 = sbr.rel (0) target = $region13
    $region12: #{tpu_custom_call.1} parent=1 // pred_region
      %s41 = ssub.s32 16, 16
      %42 = vsyncadd [#allocation5], %s41
      %s44 = sshll.u32 %s2, 4
      %s45 = int_to_ptr.vmem [resolvable:$true] %s44
      %47 = dma.vmem_to_smem %s45, 16, [#allocation8], [#allocation5]
    $region13: #{tpu_custom_call.1} parent=1 // pred_fallthru
      _
    // Predicated region
    $region14: #{tpu_custom_call.1} parent=1 // pred_check
      _
    $region15: #{tpu_custom_call.1} parent=1 // pred_check_branch
      %49 = sbr.rel (0) target = $region17
    $region16: #{tpu_custom_call.1} parent=1 // pred_region
      %s51 = ssub.s32 16, 16
      %52 = vsyncadd [#allocation10], %s51
      %s54 = sshll.u32 %s3, 4
      %s55 = int_to_ptr.vmem [resolvable:$true] %s54
      %57 = dma.vmem_to_smem %s55, 16, [#allocation9], [#allocation10]
    $region17: #{tpu_custom_call.1} parent=1 // pred_fallthru
      _
    // Predicated region
    $region18: #{tpu_custom_call.1} parent=1 // pred_check
      _
    $region19: #{tpu_custom_call.1} parent=1 // pred_check_branch
      %59 = sbr.rel (0) target = $region21
    $region20: #{tpu_custom_call.1} parent=1 // pred_region
      %60 = dma.done [#allocation3], 256
    $region21: #{tpu_custom_call.1} parent=1 // pred_fallthru
      _
    // Predicated region
    $region22: #{tpu_custom_call.1} parent=1 // pred_check
      _
    $region23: #{tpu_custom_call.1} parent=1 // pred_check_branch
      %62 = sbr.rel (0) target = $region25
    $region24: #{tpu_custom_call.1} parent=1 // pred_region
      %63 = dma.done [#allocation7], 512
    $region25: #{tpu_custom_call.1} parent=1 // pred_fallthru
      _
    // Predicated region
    $region26: #{tpu_custom_call.1} parent=1 // pred_check
      _
    $region27: #{tpu_custom_call.1} parent=1 // pred_check_branch
      %65 = sbr.rel (0) target = $region29
    $region28: #{tpu_custom_call.1} parent=1 // pred_region
      %66 = dma.done [#allocation5], 16
    $region29: #{tpu_custom_call.1} parent=1 // pred_fallthru
      _
    // Predicated region
    $region30: #{tpu_custom_call.1} parent=1 // pred_check
      _
    $region31: #{tpu_custom_call.1} parent=1 // pred_check_branch
      %68 = sbr.rel (0) target = $region33
    $region32: #{tpu_custom_call.1} parent=1 // pred_region
      %69 = dma.done [#allocation10], 16
    $region33: #{tpu_custom_call.1} parent=1 // pred_fallthru
      _
    %70 = sfence
    %v71 = vld [vmem:[#allocation2] sm:$0xff]
    %v72 = vld [vmem:[#allocation2 + $0x8] sm:$0xff]
    %v75 = vcombine.high %v71, %v71
    %v76 = vcombine.high %v72, %v72
    %vm79 = vcmask 1043456
    %v80 = vsel %vm79, %v71, -inf
    %v81 = vrot.slane %v80, 4
    %v82 = vmax.f32 %v80, %v81
    %v83 = vrot.slane %v82, 2
    %v84 = vmax.f32 %v82, %v83
    %v85 = vrot.slane %v84, 1
    %v86 = vmax.f32 %v84, %v85
    %v87 = vsel %vm79, %v75, -inf
    %v88 = vrot.slane %v87, 4
    %v89 = vmax.f32 %v87, %v88
    %v90 = vrot.slane %v89, 2
    %v91 = vmax.f32 %v89, %v90
    %v92 = vrot.slane %v91, 1
    %v93 = vmax.f32 %v91, %v92
    %v94 = vsel %vm79, %v72, -inf
    %v95 = vrot.slane %v94, 4
    %v96 = vmax.f32 %v94, %v95
    %v97 = vrot.slane %v96, 2
    %v98 = vmax.f32 %v96, %v97
    %v99 = vrot.slane %v98, 1
    %v100 = vmax.f32 %v98, %v99
    %v101 = vsel %vm79, %v76, -inf
    %v102 = vrot.slane %v101, 4
    %v103 = vmax.f32 %v101, %v102
    %v104 = vrot.slane %v103, 2
    %v105 = vmax.f32 %v103, %v104
    %v106 = vrot.slane %v105, 1
    %v107 = vmax.f32 %v105, %v106
    %v108 = vsel %vm79, %v71, 0.0
    %v109 = vrot.slane %v108, 4
    %v110 = vadd.f32 %v108, %v109
    %v111 = vrot.slane %v110, 2
    %v112 = vadd.f32 %v110, %v111
    %v113 = vrot.slane %v112, 1
    %v114 = vadd.f32 %v112, %v113
    %v115 = vsel %vm79, %v75, 0.0
    %v116 = vrot.slane %v115, 4
    %v117 = vadd.f32 %v115, %v116
    %v118 = vrot.slane %v117, 2
    %v119 = vadd.f32 %v117, %v118
    %v120 = vrot.slane %v119, 1
    %v121 = vadd.f32 %v119, %v120
    %v122 = vsel %vm79, %v72, 0.0
    %v123 = vrot.slane %v122, 4
    %v124 = vadd.f32 %v122, %v123
    %v125 = vrot.slane %v124, 2
    %v126 = vadd.f32 %v124, %v125
    %v127 = vrot.slane %v126, 1
    %v128 = vadd.f32 %v126, %v127
    %v129 = vsel %vm79, %v76, 0.0
    %v130 = vrot.slane %v129, 4
    %v131 = vadd.f32 %v129, %v130
    %v132 = vrot.slane %v131, 2
    %v133 = vadd.f32 %v131, %v132
    %v134 = vrot.slane %v133, 1
    %v135 = vadd.f32 %v133, %v134
    %v136 = vrcp.pop 4.0
    %v137 = vmul.f32 %v114, %v136
    %v138 = vmul.f32 %v121, %v136
    %v139 = vmul.f32 %v128, %v136
    %v140 = vmul.f32 %v135, %v136
    %vm145 = vcmask 1041409
    %v146 = vsel %vm145, %v100, %v86
    %v147 = vsel %vm145, %v107, %v93
    %vm154 = vcmask 1043459
    %v155 = vsel %vm154, %v139, %v137
    %v156 = vsel %vm154, %v140, %v138
    %vm159 = vcmask 1041408
    %v160 = vsel %vm159, %v146, %v155
    %v161 = vsel %vm159, %v147, %v156
    %v162 = vlaneseq
    %v163 = vshrl.u32 %v162, 7
    %vm164 = vcmp.ge.s32.totalorder %v163, 2
    %v165 = vsel %vm164, 1, 0
    %v166 = vcvt.s32.f32 %v165
    %167 = vrot.lane.b32.xlu0 %v160, 3
    %v168 = vpop.permute.xlu0 %167
    %169 = vrot.lane.b32.xlu0 %v161, 3
    %v170 = vpop.permute.xlu0 %169
    %v171 = vlaneseq
    %v172 = vand.u32 %v171, 127
    %vm173 = vcmp.lt.s32.totalorder %v172, 3
    %v174 = vsel %vm173, %v168, %v170
    %v175 = vsel %vm173, %v170, %v168
    %s176 = scalar_lea.vmem [#allocation6], 7
    %v177 = vld [vmem:[%s176] ss:$8 sm:$0x3]
    %v179 = vlaneseq
    %v180 = vshrl.u32 %v179, 7
    %v181 = vsub.s32 0, %v180
    %v182 = vrot.slane %v177, %v181
    %v183 = vlaneseq
    %v184 = vshrl.u32 %v183, 7
    %v185 = vsub.s32 1, %v184
    %v186 = vrot.slane %v177, %v185
    %v189 = vmul.f32 %v175, %v182
    %v190 = vmul.f32 %v174, %v186
    %191 = vrot.lane.b32.xlu0 %v160, 2
    %v192 = vpop.permute.xlu0 %191
    %193 = vrot.lane.b32.xlu0 %v161, 2
    %v194 = vpop.permute.xlu0 %193
    %vm195 = vcmp.lt.s32.totalorder %v172, 2
    %v196 = vsel %vm195, %v192, %v194
    %v197 = vsel %vm195, %v194, %v192
    %s198 = scalar_lea.vmem [#allocation6], 16
    %v199 = vld [vmem:[%s198] ss:$8 sm:$0x3]
    %v201 = vlaneseq
    %v202 = vshrl.u32 %v201, 7
    %v203 = vsub.s32 0, %v202
    %v204 = vrot.slane %v199, %v203
    %v205 = vlaneseq
    %v206 = vshrl.u32 %v205, 7
    %v207 = vsub.s32 1, %v206
    %v208 = vrot.slane %v199, %v207
    %v211 = vmul.f32 %v197, %v204
    %v212 = vmul.f32 %v196, %v208
    %213 = vrot.lane.b32.xlu0 %v160, 1
    %v214 = vpop.permute.xlu0 %213
    %215 = vrot.lane.b32.xlu0 %v161, 1
    %v216 = vpop.permute.xlu0 %215
    %vm217 = vcmp.lt.s32.totalorder %v172, 1
    %v218 = vsel %vm217, %v214, %v216
    %v219 = vsel %vm217, %v216, %v214
    %s220 = scalar_lea.vmem [#allocation6], 17
    %v221 = vld [vmem:[%s220] ss:$8 sm:$0x3]
    %v223 = vlaneseq
    %v224 = vshrl.u32 %v223, 7
    %v225 = vsub.s32 0, %v224
    %v226 = vrot.slane %v221, %v225
    %v227 = vlaneseq
    %v228 = vshrl.u32 %v227, 7
    %v229 = vsub.s32 1, %v228
    %v230 = vrot.slane %v221, %v229
    %v233 = vmul.f32 %v219, %v226
    %v234 = vmul.f32 %v218, %v230
    %235 = vrot.lane.b32.xlu0 %v160, 127
    %v236 = vpop.permute.xlu0 %235
    %237 = vrot.lane.b32.xlu0 %v161, 127
    %v238 = vpop.permute.xlu0 %237
    %vm239 = vcmp.lt.s32.totalorder %v172, 127
    %v240 = vsel %vm239, %v236, %v238
    %v241 = vsel %vm239, %v238, %v236
    %s242 = scalar_lea.vmem [#allocation6], 19
    %v243 = vld [vmem:[%s242] ss:$8 sm:$0x3]
    %v245 = vlaneseq
    %v246 = vshrl.u32 %v245, 7
    %v247 = vsub.s32 0, %v246
    %v248 = vrot.slane %v243, %v247
    %v249 = vlaneseq
    %v250 = vshrl.u32 %v249, 7
    %v251 = vsub.s32 1, %v250
    %v252 = vrot.slane %v243, %v251
    %v255 = vmul.f32 %v240, %v248
    %v256 = vmul.f32 %v241, %v252
    %257 = vrot.lane.b32.xlu0 %v160, 126
    %v258 = vpop.permute.xlu0 %257
    %259 = vrot.lane.b32.xlu0 %v161, 126
    %v260 = vpop.permute.xlu0 %259
    %vm261 = vcmp.lt.s32.totalorder %v172, 126
    %v262 = vsel %vm261, %v258, %v260
    %v263 = vsel %vm261, %v260, %v258
    %s264 = scalar_lea.vmem [#allocation6], 20
    %v265 = vld [vmem:[%s264] ss:$8 sm:$0x3]
    %v267 = vlaneseq
    %v268 = vshrl.u32 %v267, 7
    %v269 = vsub.s32 0, %v268
    %v270 = vrot.slane %v265, %v269
    %v271 = vlaneseq
    %v272 = vshrl.u32 %v271, 7
    %v273 = vsub.s32 1, %v272
    %v274 = vrot.slane %v265, %v273
    %v277 = vmul.f32 %v262, %v270
    %v278 = vmul.f32 %v263, %v274
    %279 = vrot.lane.b32.xlu0 %v160, 125
    %v280 = vpop.permute.xlu0 %279
    %281 = vrot.lane.b32.xlu0 %v161, 125
    %v282 = vpop.permute.xlu0 %281
    %vm283 = vcmp.lt.s32.totalorder %v172, 125
    %v284 = vsel %vm283, %v280, %v282
    %v285 = vsel %vm283, %v282, %v280
    %s286 = scalar_lea.vmem [#allocation6], 21
    %v287 = vld [vmem:[%s286] ss:$8 sm:$0x3]
    %v289 = vlaneseq
    %v290 = vshrl.u32 %v289, 7
    %v291 = vsub.s32 0, %v290
    %v292 = vrot.slane %v287, %v291
    %v293 = vlaneseq
    %v294 = vshrl.u32 %v293, 7
    %v295 = vsub.s32 1, %v294
    %v296 = vrot.slane %v287, %v295
    %v299 = vmul.f32 %v284, %v292
    %v300 = vmul.f32 %v285, %v296
    %s301 = sld [smem:[#allocation8]]
    %s302 = sld [smem:[#allocation8 + $0x31]]
    %s303 = ssub.f32 %s302, %s301
    %v304 = vstv %s303
    %v305 = vmul.f32 %v304, %v166
    %v306 = vstv %s301
    %v307 = vadd.f32 %v306, %v305
    %v308 = vmul.f32 %v307, %v189
    %v309 = vmul.f32 %v307, %v190
    %s310 = sld [smem:[#allocation8 + $0x1]]
    %s311 = sld [smem:[#allocation8 + $0x32]]
    %s312 = ssub.f32 %s311, %s310
    %v313 = vstv %s312
    %v314 = vmul.f32 %v313, %v166
    %v315 = vstv %s310
    %v316 = vadd.f32 %v315, %v314
    %v317 = vmul.f32 %v316, %v211
    %v318 = vmul.f32 %v316, %v212
    %v319 = vadd.f32 %v308, %v317
    %v320 = vadd.f32 %v309, %v318
    %s321 = sld [smem:[#allocation8 + $0x2]]
    %s322 = sld [smem:[#allocation8 + $0x33]]
    %s323 = ssub.f32 %s322, %s321
    %v324 = vstv %s323
    %v325 = vmul.f32 %v324, %v166
    %v326 = vstv %s321
    %v327 = vadd.f32 %v326, %v325
    %v328 = vmul.f32 %v327, %v233
    %v329 = vmul.f32 %v327, %v234
    %v330 = vadd.f32 %v319, %v328
    %v331 = vadd.f32 %v320, %v329
    %s332 = sld [smem:[#allocation8 + $0x3]]
    %s333 = sld [smem:[#allocation8 + $0x34]]
    %s334 = ssub.f32 %s333, %s332
    %v335 = vstv %s334
    %v336 = vmul.f32 %v335, %v166
    %v337 = vstv %s332
    %v338 = vadd.f32 %v337, %v336
    %v339 = vmul.f32 %v338, %v160
    %v340 = vmul.f32 %v338, %v161
    %v341 = vadd.f32 %v330, %v339
    %v342 = vadd.f32 %v331, %v340
    %s343 = sld [smem:[#allocation8 + $0x4]]
    %s344 = sld [smem:[#allocation8 + $0x35]]
    %s345 = ssub.f32 %s344, %s343
    %v346 = vstv %s345
    %v347 = vmul.f32 %v346, %v166
    %v348 = vstv %s343
    %v349 = vadd.f32 %v348, %v347
    %v350 = vmul.f32 %v349, %v255
    %v351 = vmul.f32 %v349, %v256
    %v352 = vadd.f32 %v341, %v350
    %v353 = vadd.f32 %v342, %v351
    %s354 = sld [smem:[#allocation8 + $0x5]]
    %s355 = sld [smem:[#allocation8 + $0x36]]
    %s356 = ssub.f32 %s355, %s354
    %v357 = vstv %s356
    %v358 = vmul.f32 %v357, %v166
    %v359 = vstv %s354
    %v360 = vadd.f32 %v359, %v358
    %v361 = vmul.f32 %v360, %v277
    %v362 = vmul.f32 %v360, %v278
    %v363 = vadd.f32 %v352, %v361
    %v364 = vadd.f32 %v353, %v362
    %s365 = sld [smem:[#allocation8 + $0x6]]
    %s366 = sld [smem:[#allocation8 + $0x37]]
    %s367 = ssub.f32 %s366, %s365
    %v368 = vstv %s367
    %v369 = vmul.f32 %v368, %v166
    %v370 = vstv %s365
    %v371 = vadd.f32 %v370, %v369
    %v372 = vmul.f32 %v371, %v299
    %v373 = vmul.f32 %v371, %v300
    %v374 = vadd.f32 %v363, %v372
    %v375 = vadd.f32 %v364, %v373
    %376 = vrot.lane.b32.xlu0 %v374, 48
    %v377 = vpop.permute.xlu0 %376
    %378 = vrot.lane.b32.xlu0 %v375, 48
    %v379 = vpop.permute.xlu0 %378
    %vm380 = vcmp.lt.s32.totalorder %v172, 48
    %v381 = vsel %vm380, %v377, %v379
    %v382 = vsel %vm380, %v379, %v377
    %v383 = vld [vmem:[#allocation6] ss:$8 sm:$0x3]
    %v385 = vlaneseq
    %v386 = vshrl.u32 %v385, 7
    %v387 = vsub.s32 0, %v386
    %v388 = vrot.slane %v383, %v387
    %v389 = vlaneseq
    %v390 = vshrl.u32 %v389, 7
    %v391 = vsub.s32 1, %v390
    %v392 = vrot.slane %v383, %v391
    %v395 = vmul.f32 %v382, %v388
    %v396 = vmul.f32 %v381, %v392
    %v397 = vadd.f32 %v395, 0.0
    %v398 = vadd.f32 %v396, 0.0
    %s399 = sld [smem:[#allocation8 + $0x7]]
    %s400 = sld [smem:[#allocation8 + $0x38]]
    %s401 = ssub.f32 %s400, %s399
    %v402 = vstv %s401
    %v403 = vmul.f32 %v402, %v166
    %v404 = vstv %s399
    %v405 = vadd.f32 %v404, %v403
    %v406 = vmul.f32 %v405, %v189
    %v407 = vmul.f32 %v405, %v190
    %s408 = sld [smem:[#allocation8 + $0x8]]
    %s409 = sld [smem:[#allocation8 + $0x39]]
    %s410 = ssub.f32 %s409, %s408
    %v411 = vstv %s410
    %v412 = vmul.f32 %v411, %v166
    %v413 = vstv %s408
    %v414 = vadd.f32 %v413, %v412
    %v415 = vmul.f32 %v414, %v211
    %v416 = vmul.f32 %v414, %v212
    %v417 = vadd.f32 %v406, %v415
    %v418 = vadd.f32 %v407, %v416
    %s419 = sld [smem:[#allocation8 + $0x9]]
    %s420 = sld [smem:[#allocation8 + $0x3a]]
    %s421 = ssub.f32 %s420, %s419
    %v422 = vstv %s421
    %v423 = vmul.f32 %v422, %v166
    %v424 = vstv %s419
    %v425 = vadd.f32 %v424, %v423
    %v426 = vmul.f32 %v425, %v233
    %v427 = vmul.f32 %v425, %v234
    %v428 = vadd.f32 %v417, %v426
    %v429 = vadd.f32 %v418, %v427
    %s430 = sld [smem:[#allocation8 + $0xa]]
    %s431 = sld [smem:[#allocation8 + $0x3b]]
    %s432 = ssub.f32 %s431, %s430
    %v433 = vstv %s432
    %v434 = vmul.f32 %v433, %v166
    %v435 = vstv %s430
    %v436 = vadd.f32 %v435, %v434
    %v437 = vmul.f32 %v436, %v160
    %v438 = vmul.f32 %v436, %v161
    %v439 = vadd.f32 %v428, %v437
    %v440 = vadd.f32 %v429, %v438
    %s441 = sld [smem:[#allocation8 + $0xb]]
    %s442 = sld [smem:[#allocation8 + $0x3c]]
    %s443 = ssub.f32 %s442, %s441
    %v444 = vstv %s443
    %v445 = vmul.f32 %v444, %v166
    %v446 = vstv %s441
    %v447 = vadd.f32 %v446, %v445
    %v448 = vmul.f32 %v447, %v255
    %v449 = vmul.f32 %v447, %v256
    %v450 = vadd.f32 %v439, %v448
    %v451 = vadd.f32 %v440, %v449
    %s452 = sld [smem:[#allocation8 + $0xc]]
    %s453 = sld [smem:[#allocation8 + $0x3d]]
    %s454 = ssub.f32 %s453, %s452
    %v455 = vstv %s454
    %v456 = vmul.f32 %v455, %v166
    %v457 = vstv %s452
    %v458 = vadd.f32 %v457, %v456
    %v459 = vmul.f32 %v458, %v277
    %v460 = vmul.f32 %v458, %v278
    %v461 = vadd.f32 %v450, %v459
    %v462 = vadd.f32 %v451, %v460
    %s463 = sld [smem:[#allocation8 + $0xd]]
    %s464 = sld [smem:[#allocation8 + $0x3e]]
    %s465 = ssub.f32 %s464, %s463
    %v466 = vstv %s465
    %v467 = vmul.f32 %v466, %v166
    %v468 = vstv %s463
    %v469 = vadd.f32 %v468, %v467
    %v470 = vmul.f32 %v469, %v299
    %v471 = vmul.f32 %v469, %v300
    %v472 = vadd.f32 %v461, %v470
    %v473 = vadd.f32 %v462, %v471
    %474 = vrot.lane.b32.xlu0 %v472, 32
    %v475 = vpop.permute.xlu0 %474
    %476 = vrot.lane.b32.xlu0 %v473, 32
    %v477 = vpop.permute.xlu0 %476
    %vm478 = vcmp.lt.s32.totalorder %v172, 32
    %v479 = vsel %vm478, %v475, %v477
    %v480 = vsel %vm478, %v477, %v475
    %s481 = scalar_lea.vmem [#allocation6], 1
    %v482 = vld [vmem:[%s481] ss:$8 sm:$0x3]
    %v484 = vlaneseq
    %v485 = vshrl.u32 %v484, 7
    %v486 = vsub.s32 0, %v485
    %v487 = vrot.slane %v482, %v486
    %v488 = vlaneseq
    %v489 = vshrl.u32 %v488, 7
    %v490 = vsub.s32 1, %v489
    %v491 = vrot.slane %v482, %v490
    %v494 = vmul.f32 %v480, %v487
    %v495 = vmul.f32 %v479, %v491
    %v496 = vadd.f32 %v397, %v494
    %v497 = vadd.f32 %v398, %v495
    %s498 = sld [smem:[#allocation8 + $0xe]]
    %s499 = sld [smem:[#allocation8 + $0x3f]]
    %s500 = ssub.f32 %s499, %s498
    %v501 = vstv %s500
    %v502 = vmul.f32 %v501, %v166
    %v503 = vstv %s498
    %v504 = vadd.f32 %v503, %v502
    %v505 = vmul.f32 %v504, %v189
    %v506 = vmul.f32 %v504, %v190
    %s507 = sld [smem:[#allocation8 + $0xf]]
    %s508 = sld [smem:[#allocation8 + $0x40]]
    %s509 = ssub.f32 %s508, %s507
    %v510 = vstv %s509
    %v511 = vmul.f32 %v510, %v166
    %v512 = vstv %s507
    %v513 = vadd.f32 %v512, %v511
    %v514 = vmul.f32 %v513, %v211
    %v515 = vmul.f32 %v513, %v212
    %v516 = vadd.f32 %v505, %v514
    %v517 = vadd.f32 %v506, %v515
    %s518 = sld [smem:[#allocation8 + $0x10]]
    %s519 = sld [smem:[#allocation8 + $0x41]]
    %s520 = ssub.f32 %s519, %s518
    %v521 = vstv %s520
    %v522 = vmul.f32 %v521, %v166
    %v523 = vstv %s518
    %v524 = vadd.f32 %v523, %v522
    %v525 = vmul.f32 %v524, %v233
    %v526 = vmul.f32 %v524, %v234
    %v527 = vadd.f32 %v516, %v525
    %v528 = vadd.f32 %v517, %v526
    %s529 = sld [smem:[#allocation8 + $0x11]]
    %s530 = sld [smem:[#allocation8 + $0x42]]
    %s531 = ssub.f32 %s530, %s529
    %v532 = vstv %s531
    %v533 = vmul.f32 %v532, %v166
    %v534 = vstv %s529
    %v535 = vadd.f32 %v534, %v533
    %v536 = vmul.f32 %v535, %v160
    %v537 = vmul.f32 %v535, %v161
    %v538 = vadd.f32 %v527, %v536
    %v539 = vadd.f32 %v528, %v537
    %s540 = sld [smem:[#allocation8 + $0x12]]
    %s541 = sld [smem:[#allocation8 + $0x43]]
    %s542 = ssub.f32 %s541, %s540
    %v543 = vstv %s542
    %v544 = vmul.f32 %v543, %v166
    %v545 = vstv %s540
    %v546 = vadd.f32 %v545, %v544
    %v547 = vmul.f32 %v546, %v255
    %v548 = vmul.f32 %v546, %v256
    %v549 = vadd.f32 %v538, %v547
    %v550 = vadd.f32 %v539, %v548
    %s551 = sld [smem:[#allocation8 + $0x13]]
    %s552 = sld [smem:[#allocation8 + $0x44]]
    %s553 = ssub.f32 %s552, %s551
    %v554 = vstv %s553
    %v555 = vmul.f32 %v554, %v166
    %v556 = vstv %s551
    %v557 = vadd.f32 %v556, %v555
    %v558 = vmul.f32 %v557, %v277
    %v559 = vmul.f32 %v557, %v278
    %v560 = vadd.f32 %v549, %v558
    %v561 = vadd.f32 %v550, %v559
    %s562 = sld [smem:[#allocation8 + $0x14]]
    %s563 = sld [smem:[#allocation8 + $0x45]]
    %s564 = ssub.f32 %s563, %s562
    %v565 = vstv %s564
    %v566 = vmul.f32 %v565, %v166
    %v567 = vstv %s562
    %v568 = vadd.f32 %v567, %v566
    %v569 = vmul.f32 %v568, %v299
    %v570 = vmul.f32 %v568, %v300
    %v571 = vadd.f32 %v560, %v569
    %v572 = vadd.f32 %v561, %v570
    %573 = vrot.lane.b32.xlu0 %v571, 16
    %v574 = vpop.permute.xlu0 %573
    %575 = vrot.lane.b32.xlu0 %v572, 16
    %v576 = vpop.permute.xlu0 %575
    %vm577 = vcmp.lt.s32.totalorder %v172, 16
    %v578 = vsel %vm577, %v574, %v576
    %v579 = vsel %vm577, %v576, %v574
    %s580 = scalar_lea.vmem [#allocation6], 2
    %v581 = vld [vmem:[%s580] ss:$8 sm:$0x3]
    %v583 = vlaneseq
    %v584 = vshrl.u32 %v583, 7
    %v585 = vsub.s32 0, %v584
    %v586 = vrot.slane %v581, %v585
    %v587 = vlaneseq
    %v588 = vshrl.u32 %v587, 7
    %v589 = vsub.s32 1, %v588
    %v590 = vrot.slane %v581, %v589
    %v593 = vmul.f32 %v579, %v586
    %v594 = vmul.f32 %v578, %v590
    %v595 = vadd.f32 %v496, %v593
    %v596 = vadd.f32 %v497, %v594
    %s597 = sld [smem:[#allocation8 + $0x15]]
    %s598 = sld [smem:[#allocation8 + $0x46]]
    %s599 = ssub.f32 %s598, %s597
    %v600 = vstv %s599
    %v601 = vmul.f32 %v600, %v166
    %v602 = vstv %s597
    %v603 = vadd.f32 %v602, %v601
    %v604 = vmul.f32 %v603, %v189
    %v605 = vmul.f32 %v603, %v190
    %s606 = sld [smem:[#allocation8 + $0x16]]
    %s607 = sld [smem:[#allocation8 + $0x47]]
    %s608 = ssub.f32 %s607, %s606
    %v609 = vstv %s608
    %v610 = vmul.f32 %v609, %v166
    %v611 = vstv %s606
    %v612 = vadd.f32 %v611, %v610
    %v613 = vmul.f32 %v612, %v211
    %v614 = vmul.f32 %v612, %v212
    %v615 = vadd.f32 %v604, %v613
    %v616 = vadd.f32 %v605, %v614
    %s617 = sld [smem:[#allocation8 + $0x17]]
    %s618 = sld [smem:[#allocation8 + $0x48]]
    %s619 = ssub.f32 %s618, %s617
    %v620 = vstv %s619
    %v621 = vmul.f32 %v620, %v166
    %v622 = vstv %s617
    %v623 = vadd.f32 %v622, %v621
    %v624 = vmul.f32 %v623, %v233
    %v625 = vmul.f32 %v623, %v234
    %v626 = vadd.f32 %v615, %v624
    %v627 = vadd.f32 %v616, %v625
    %s628 = sld [smem:[#allocation8 + $0x18]]
    %s629 = sld [smem:[#allocation8 + $0x49]]
    %s630 = ssub.f32 %s629, %s628
    %v631 = vstv %s630
    %v632 = vmul.f32 %v631, %v166
    %v633 = vstv %s628
    %v634 = vadd.f32 %v633, %v632
    %v635 = vmul.f32 %v634, %v160
    %v636 = vmul.f32 %v634, %v161
    %v637 = vadd.f32 %v626, %v635
    %v638 = vadd.f32 %v627, %v636
    %s639 = sld [smem:[#allocation8 + $0x19]]
    %s640 = sld [smem:[#allocation8 + $0x4a]]
    %s641 = ssub.f32 %s640, %s639
    %v642 = vstv %s641
    %v643 = vmul.f32 %v642, %v166
    %v644 = vstv %s639
    %v645 = vadd.f32 %v644, %v643
    %v646 = vmul.f32 %v645, %v255
    %v647 = vmul.f32 %v645, %v256
    %v648 = vadd.f32 %v637, %v646
    %v649 = vadd.f32 %v638, %v647
    %s650 = sld [smem:[#allocation8 + $0x1a]]
    %s651 = sld [smem:[#allocation8 + $0x4b]]
    %s652 = ssub.f32 %s651, %s650
    %v653 = vstv %s652
    %v654 = vmul.f32 %v653, %v166
    %v655 = vstv %s650
    %v656 = vadd.f32 %v655, %v654
    %v657 = vmul.f32 %v656, %v277
    %v658 = vmul.f32 %v656, %v278
    %v659 = vadd.f32 %v648, %v657
    %v660 = vadd.f32 %v649, %v658
    %s661 = sld [smem:[#allocation8 + $0x1b]]
    %s662 = sld [smem:[#allocation8 + $0x4c]]
    %s663 = ssub.f32 %s662, %s661
    %v664 = vstv %s663
    %v665 = vmul.f32 %v664, %v166
    %v666 = vstv %s661
    %v667 = vadd.f32 %v666, %v665
    %v668 = vmul.f32 %v667, %v299
    %v669 = vmul.f32 %v667, %v300
    %v670 = vadd.f32 %v659, %v668
    %v671 = vadd.f32 %v660, %v669
    %v672 = vadd.f32 %v595, %v670
    %v673 = vadd.f32 %v596, %v671
    %s674 = sld [smem:[#allocation8 + $0x1c]]
    %s675 = sld [smem:[#allocation8 + $0x4d]]
    %s676 = ssub.f32 %s675, %s674
    %v677 = vstv %s676
    %v678 = vmul.f32 %v677, %v166
    %v679 = vstv %s674
    %v680 = vadd.f32 %v679, %v678
    %v681 = vmul.f32 %v680, %v189
    %v682 = vmul.f32 %v680, %v190
    %s683 = sld [smem:[#allocation8 + $0x1d]]
    %s684 = sld [smem:[#allocation8 + $0x4e]]
    %s685 = ssub.f32 %s684, %s683
    %v686 = vstv %s685
    %v687 = vmul.f32 %v686, %v166
    %v688 = vstv %s683
    %v689 = vadd.f32 %v688, %v687
    %v690 = vmul.f32 %v689, %v211
    %v691 = vmul.f32 %v689, %v212
    %v692 = vadd.f32 %v681, %v690
    %v693 = vadd.f32 %v682, %v691
    %s694 = sld [smem:[#allocation8 + $0x1e]]
    %s695 = sld [smem:[#allocation8 + $0x4f]]
    %s696 = ssub.f32 %s695, %s694
    %v697 = vstv %s696
    %v698 = vmul.f32 %v697, %v166
    %v699 = vstv %s694
    %v700 = vadd.f32 %v699, %v698
    %v701 = vmul.f32 %v700, %v233
    %v702 = vmul.f32 %v700, %v234
    %v703 = vadd.f32 %v692, %v701
    %v704 = vadd.f32 %v693, %v702
    %s705 = sld [smem:[#allocation8 + $0x1f]]
    %s706 = sld [smem:[#allocation8 + $0x50]]
    %s707 = ssub.f32 %s706, %s705
    %v708 = vstv %s707
    %v709 = vmul.f32 %v708, %v166
    %v710 = vstv %s705
    %v711 = vadd.f32 %v710, %v709
    %v712 = vmul.f32 %v711, %v160
    %v713 = vmul.f32 %v711, %v161
    %v714 = vadd.f32 %v703, %v712
    %v715 = vadd.f32 %v704, %v713
    %s716 = sld [smem:[#allocation8 + $0x20]]
    %s717 = sld [smem:[#allocation8 + $0x51]]
    %s718 = ssub.f32 %s717, %s716
    %v719 = vstv %s718
    %v720 = vmul.f32 %v719, %v166
    %v721 = vstv %s716
    %v722 = vadd.f32 %v721, %v720
    %v723 = vmul.f32 %v722, %v255
    %v724 = vmul.f32 %v722, %v256
    %v725 = vadd.f32 %v714, %v723
    %v726 = vadd.f32 %v715, %v724
    %s727 = sld [smem:[#allocation8 + $0x21]]
    %s728 = sld [smem:[#allocation8 + $0x52]]
    %s729 = ssub.f32 %s728, %s727
    %v730 = vstv %s729
    %v731 = vmul.f32 %v730, %v166
    %v732 = vstv %s727
    %v733 = vadd.f32 %v732, %v731
    %v734 = vmul.f32 %v733, %v277
    %v735 = vmul.f32 %v733, %v278
    %v736 = vadd.f32 %v725, %v734
    %v737 = vadd.f32 %v726, %v735
    %s738 = sld [smem:[#allocation8 + $0x22]]
    %s739 = sld [smem:[#allocation8 + $0x53]]
    %s740 = ssub.f32 %s739, %s738
    %v741 = vstv %s740
    %v742 = vmul.f32 %v741, %v166
    %v743 = vstv %s738
    %v744 = vadd.f32 %v743, %v742
    %v745 = vmul.f32 %v744, %v299
    %v746 = vmul.f32 %v744, %v300
    %v747 = vadd.f32 %v736, %v745
    %v748 = vadd.f32 %v737, %v746
    %749 = vrot.lane.b32.xlu0 %v747, 112
    %v750 = vpop.permute.xlu0 %749
    %751 = vrot.lane.b32.xlu0 %v748, 112
    %v752 = vpop.permute.xlu0 %751
    %vm753 = vcmp.lt.s32.totalorder %v172, 112
    %v754 = vsel %vm753, %v750, %v752
    %v755 = vsel %vm753, %v752, %v750
    %s756 = scalar_lea.vmem [#allocation6], 4
    %v757 = vld [vmem:[%s756] ss:$8 sm:$0x3]
    %v759 = vlaneseq
    %v760 = vshrl.u32 %v759, 7
    %v761 = vsub.s32 0, %v760
    %v762 = vrot.slane %v757, %v761
    %v763 = vlaneseq
    %v764 = vshrl.u32 %v763, 7
    %v765 = vsub.s32 1, %v764
    %v766 = vrot.slane %v757, %v765
    %v769 = vmul.f32 %v754, %v762
    %v770 = vmul.f32 %v755, %v766
    %v771 = vadd.f32 %v672, %v769
    %v772 = vadd.f32 %v673, %v770
    %s773 = sld [smem:[#allocation8 + $0x23]]
    %s774 = sld [smem:[#allocation8 + $0x54]]
    %s775 = ssub.f32 %s774, %s773
    %v776 = vstv %s775
    %v777 = vmul.f32 %v776, %v166
    %v778 = vstv %s773
    %v779 = vadd.f32 %v778, %v777
    %v780 = vmul.f32 %v779, %v189
    %v781 = vmul.f32 %v779, %v190
    %s782 = sld [smem:[#allocation8 + $0x24]]
    %s783 = sld [smem:[#allocation8 + $0x55]]
    %s784 = ssub.f32 %s783, %s782
    %v785 = vstv %s784
    %v786 = vmul.f32 %v785, %v166
    %v787 = vstv %s782
    %v788 = vadd.f32 %v787, %v786
    %v789 = vmul.f32 %v788, %v211
    %v790 = vmul.f32 %v788, %v212
    %v791 = vadd.f32 %v780, %v789
    %v792 = vadd.f32 %v781, %v790
    %s793 = sld [smem:[#allocation8 + $0x25]]
    %s794 = sld [smem:[#allocation8 + $0x56]]
    %s795 = ssub.f32 %s794, %s793
    %v796 = vstv %s795
    %v797 = vmul.f32 %v796, %v166
    %v798 = vstv %s793
    %v799 = vadd.f32 %v798, %v797
    %v800 = vmul.f32 %v799, %v233
    %v801 = vmul.f32 %v799, %v234
    %v802 = vadd.f32 %v791, %v800
    %v803 = vadd.f32 %v792, %v801
    %s804 = sld [smem:[#allocation8 + $0x26]]
    %s805 = sld [smem:[#allocation8 + $0x57]]
    %s806 = ssub.f32 %s805, %s804
    %v807 = vstv %s806
    %v808 = vmul.f32 %v807, %v166
    %v809 = vstv %s804
    %v810 = vadd.f32 %v809, %v808
    %v811 = vmul.f32 %v810, %v160
    %v812 = vmul.f32 %v810, %v161
    %v813 = vadd.f32 %v802, %v811
    %v814 = vadd.f32 %v803, %v812
    %s815 = sld [smem:[#allocation8 + $0x27]]
    %s816 = sld [smem:[#allocation8 + $0x58]]
    %s817 = ssub.f32 %s816, %s815
    %v818 = vstv %s817
    %v819 = vmul.f32 %v818, %v166
    %v820 = vstv %s815
    %v821 = vadd.f32 %v820, %v819
    %v822 = vmul.f32 %v821, %v255
    %v823 = vmul.f32 %v821, %v256
    %v824 = vadd.f32 %v813, %v822
    %v825 = vadd.f32 %v814, %v823
    %s826 = sld [smem:[#allocation8 + $0x28]]
    %s827 = sld [smem:[#allocation8 + $0x59]]
    %s828 = ssub.f32 %s827, %s826
    %v829 = vstv %s828
    %v830 = vmul.f32 %v829, %v166
    %v831 = vstv %s826
    %v832 = vadd.f32 %v831, %v830
    %v833 = vmul.f32 %v832, %v277
    %v834 = vmul.f32 %v832, %v278
    %v835 = vadd.f32 %v824, %v833
    %v836 = vadd.f32 %v825, %v834
    %s837 = sld [smem:[#allocation8 + $0x29]]
    %s838 = sld [smem:[#allocation8 + $0x5a]]
    %s839 = ssub.f32 %s838, %s837
    %v840 = vstv %s839
    %v841 = vmul.f32 %v840, %v166
    %v842 = vstv %s837
    %v843 = vadd.f32 %v842, %v841
    %v844 = vmul.f32 %v843, %v299
    %v845 = vmul.f32 %v843, %v300
    %v846 = vadd.f32 %v835, %v844
    %v847 = vadd.f32 %v836, %v845
    %848 = vrot.lane.b32.xlu0 %v846, 96
    %v849 = vpop.permute.xlu0 %848
    %850 = vrot.lane.b32.xlu0 %v847, 96
    %v851 = vpop.permute.xlu0 %850
    %vm852 = vcmp.lt.s32.totalorder %v172, 96
    %v853 = vsel %vm852, %v849, %v851
    %v854 = vsel %vm852, %v851, %v849
    %s855 = scalar_lea.vmem [#allocation6], 5
    %v856 = vld [vmem:[%s855] ss:$8 sm:$0x3]
    %v858 = vlaneseq
    %v859 = vshrl.u32 %v858, 7
    %v860 = vsub.s32 0, %v859
    %v861 = vrot.slane %v856, %v860
    %v862 = vlaneseq
    %v863 = vshrl.u32 %v862, 7
    %v864 = vsub.s32 1, %v863
    %v865 = vrot.slane %v856, %v864
    %v868 = vmul.f32 %v853, %v861
    %v869 = vmul.f32 %v854, %v865
    %v870 = vadd.f32 %v771, %v868
    %v871 = vadd.f32 %v772, %v869
    %s872 = sld [smem:[#allocation8 + $0x2a]]
    %s873 = sld [smem:[#allocation8 + $0x5b]]
    %s874 = ssub.f32 %s873, %s872
    %v875 = vstv %s874
    %v876 = vmul.f32 %v875, %v166
    %v877 = vstv %s872
    %v878 = vadd.f32 %v877, %v876
    %v879 = vmul.f32 %v878, %v189
    %v880 = vmul.f32 %v878, %v190
    %s881 = sld [smem:[#allocation8 + $0x2b]]
    %s882 = sld [smem:[#allocation8 + $0x5c]]
    %s883 = ssub.f32 %s882, %s881
    %v884 = vstv %s883
    %v885 = vmul.f32 %v884, %v166
    %v886 = vstv %s881
    %v887 = vadd.f32 %v886, %v885
    %v888 = vmul.f32 %v887, %v211
    %v889 = vmul.f32 %v887, %v212
    %v890 = vadd.f32 %v879, %v888
    %v891 = vadd.f32 %v880, %v889
    %s892 = sld [smem:[#allocation8 + $0x2c]]
    %s893 = sld [smem:[#allocation8 + $0x5d]]
    %s894 = ssub.f32 %s893, %s892
    %v895 = vstv %s894
    %v896 = vmul.f32 %v895, %v166
    %v897 = vstv %s892
    %v898 = vadd.f32 %v897, %v896
    %v899 = vmul.f32 %v898, %v233
    %v900 = vmul.f32 %v898, %v234
    %v901 = vadd.f32 %v890, %v899
    %v902 = vadd.f32 %v891, %v900
    %s903 = sld [smem:[#allocation8 + $0x2d]]
    %s904 = sld [smem:[#allocation8 + $0x5e]]
    %s905 = ssub.f32 %s904, %s903
    %v906 = vstv %s905
    %v907 = vmul.f32 %v906, %v166
    %v908 = vstv %s903
    %v909 = vadd.f32 %v908, %v907
    %v910 = vmul.f32 %v909, %v160
    %v911 = vmul.f32 %v909, %v161
    %v912 = vadd.f32 %v901, %v910
    %v913 = vadd.f32 %v902, %v911
    %s914 = sld [smem:[#allocation8 + $0x2e]]
    %s915 = sld [smem:[#allocation8 + $0x5f]]
    %s916 = ssub.f32 %s915, %s914
    %v917 = vstv %s916
    %v918 = vmul.f32 %v917, %v166
    %v919 = vstv %s914
    %v920 = vadd.f32 %v919, %v918
    %v921 = vmul.f32 %v920, %v255
    %v922 = vmul.f32 %v920, %v256
    %v923 = vadd.f32 %v912, %v921
    %v924 = vadd.f32 %v913, %v922
    %s925 = sld [smem:[#allocation8 + $0x2f]]
    %s926 = sld [smem:[#allocation8 + $0x60]]
    %s927 = ssub.f32 %s926, %s925
    %v928 = vstv %s927
    %v929 = vmul.f32 %v928, %v166
    %v930 = vstv %s925
    %v931 = vadd.f32 %v930, %v929
    %v932 = vmul.f32 %v931, %v277
    %v933 = vmul.f32 %v931, %v278
    %v934 = vadd.f32 %v923, %v932
    %v935 = vadd.f32 %v924, %v933
    %s936 = sld [smem:[#allocation8 + $0x30]]
    %s937 = sld [smem:[#allocation8 + $0x61]]
    %s938 = ssub.f32 %s937, %s936
    %v939 = vstv %s938
    %v940 = vmul.f32 %v939, %v166
    %v941 = vstv %s936
    %v942 = vadd.f32 %v941, %v940
    %v943 = vmul.f32 %v942, %v299
    %v944 = vmul.f32 %v942, %v300
    %v945 = vadd.f32 %v934, %v943
    %v946 = vadd.f32 %v935, %v944
    %947 = vrot.lane.b32.xlu0 %v945, 80
    %v948 = vpop.permute.xlu0 %947
    %949 = vrot.lane.b32.xlu0 %v946, 80
    %v950 = vpop.permute.xlu0 %949
    %vm951 = vcmp.lt.s32.totalorder %v172, 80
    %v952 = vsel %vm951, %v948, %v950
    %v953 = vsel %vm951, %v950, %v948
    %s954 = scalar_lea.vmem [#allocation6], 6
    %v955 = vld [vmem:[%s954] ss:$8 sm:$0x3]
    %v957 = vlaneseq
    %v958 = vshrl.u32 %v957, 7
    %v959 = vsub.s32 0, %v958
    %v960 = vrot.slane %v955, %v959
    %v961 = vlaneseq
    %v962 = vshrl.u32 %v961, 7
    %v963 = vsub.s32 1, %v962
    %v964 = vrot.slane %v955, %v963
    %v967 = vmul.f32 %v952, %v960
    %v968 = vmul.f32 %v953, %v964
    %v969 = vadd.f32 %v870, %v967
    %v970 = vadd.f32 %v871, %v968
    %v973 = vrot.slane %v969, 2
    %v974 = vrot.slane %v970, 2
    %v977 = vadd.f32 %v969, %v973
    %v978 = vadd.f32 %v970, %v974
    %s979 = sld [smem:[#allocation9]]
    %v980 = vstv %s979
    %v981 = vmul.f32 %v977, %v980
    %v982 = vmul.f32 %v978, %v980
    %s983 = sld [smem:[#allocation9 + $0x1]]
    %v984 = vstv %s983
    %v985 = vadd.f32 %v981, %v984
    %v986 = vadd.f32 %v982, %v984
    %v987 = vmul.f32 %v985, 0.5
    %v988 = vmul.f32 %v986, 0.5
    %v989 = vtanh.pop %v987
    %v990 = vtanh.pop %v988
    %v991 = vadd.f32 %v989, 1.0
    %v992 = vadd.f32 %v990, 1.0
    %v993 = vmul.f32 %v991, 0.5
    %v994 = vmul.f32 %v992, 0.5
    %v997 = vcombine.low %v993, %v994
    %v999 = vunpack.c.l.s4 1966171168
    %v1000 = vunpack.c.0.s8 %v999
    %v1001 = vlaneseq
    %v1002 = vshrl.u32 %v1001, 7
    %v1003 = vsub.s32 %v1000, %v1002
    %v1004 = vrot.slane %v997, %v1003
    %v1005 = vcombine.high %v1004, %v1004
    %v1007 = vunpack.c.l.s4 1966171168
    %v1008 = vunpack.c.0.s8 %v1007
    %v1009 = vlaneseq
    %v1010 = vshrl.u32 %v1009, 7
    %v1011 = vsub.s32 %v1008, %v1010
    %v1012 = vrot.slane %v1004, %v1011
    %v1014 = vunpack.c.l.s4 1966171168
    %v1015 = vunpack.c.0.s8 %v1014
    %v1016 = vlaneseq
    %v1017 = vshrl.u32 %v1016, 7
    %v1018 = vsub.s32 %v1015, %v1017
    %v1019 = vrot.slane %v1005, %v1018
    %v1020 = vlaneseq
    %v1021 = vshrl.u32 %v1020, 7
    %v1022 = vsub.s32 0, %v1021
    %v1023 = vrot.slane %v1012, %v1022
    %v1024 = vlaneseq
    %v1025 = vshrl.u32 %v1024, 7
    %v1026 = vsub.s32 1, %v1025
    %v1027 = vrot.slane %v1012, %v1026
    %v1028 = vlaneseq
    %v1029 = vshrl.u32 %v1028, 7
    %v1030 = vsub.s32 0, %v1029
    %v1031 = vrot.slane %v1019, %v1030
    %v1032 = vlaneseq
    %v1033 = vshrl.u32 %v1032, 7
    %v1034 = vsub.s32 1, %v1033
    %v1035 = vrot.slane %v1019, %v1034
    %v1036 = vcombine.low %v1023, %v1027
    %v1037 = vcombine.low %v1031, %v1035
    %v1040 = vmul.f32 %v71, %v1036
    %v1041 = vmul.f32 %v72, %v1037
    %1042 = vst [vmem:[#allocation11] sm:$0xff] %v1040
    %1043 = vst [vmem:[#allocation11 + $0x8] sm:$0xff] %v1041
    // Predicated region
    $region34: #{tpu_custom_call.1} parent=1 // pred_check
      _
    $region35: #{tpu_custom_call.1} parent=1 // pred_check_branch
      %1045 = sbr.rel (0) target = $region37
    $region36: #{tpu_custom_call.1} parent=1 // pred_region
      %s1047 = ssub.s32 256, 256
      %1048 = vsyncadd [#allocation4], %s1047
      %s1049 = sshll.u32 [#allocation11], 4
      %s1050 = int_to_ptr.vmem [resolvable:$true] %s1049
      %1055 = dma.vmem_to_hbm [thread:$0]  %s1050, 256, %s4, [#allocation4], 128, 128, 8
    $region37: #{tpu_custom_call.1} parent=1 // pred_fallthru
      _
    // Predicated region
    $region38: #{tpu_custom_call.1} parent=1 // pred_check
      _
    $region39: #{tpu_custom_call.1} parent=1 // pred_check_branch
      %1057 = sbr.rel (0) target = $region41
    $region40: #{tpu_custom_call.1} parent=1 // pred_region
      %1058 = dma.done [#allocation4], 256
    $region41: #{tpu_custom_call.1} parent=1 // pred_fallthru
      _
    %1059 = vsyncpa [#allocation3], 1
    %1060 = vsyncpa [#allocation7], 1
    %1061 = vsyncpa [#allocation4], 1
    %1062 = vsyncpa [#allocation5], 1
    %1063 = vsyncpa [#allocation10], 1

</llo_original>
